<compile_context>
chip_gen: v7x
topology: tpu7x:2x2x1
jax: 0.10.0
libtpu: 0.0.40
codegen_flags: <defaults>
</compile_context>

<pallas_src>
import functools
import math

import jax
import jax.numpy as jnp
from jax.experimental import pallas as pl
from jax.experimental.pallas import tpu as pltpu

LN_EPS = 1e-5
LANE = 128


# ----------------------------------------------------------------------------
# small helpers
# ----------------------------------------------------------------------------
def _round_up(x, m):
    return ((x + m - 1) // m) * m


def _silu(x):
    return x * jax.nn.sigmoid(x)


def _layer_norm(x, gamma, beta, eps=LN_EPS):
    mu = jnp.mean(x, axis=-1, keepdims=True)
    var = jnp.mean((x - mu) ** 2, axis=-1, keepdims=True)
    return (x - mu) * jax.lax.rsqrt(var + eps) * gamma + beta


def _vmem_capacity_bytes():
    """Physical VMEM per TensorCore, with a conservative fallback."""
    try:
        info = pltpu.get_tpu_info()
        cap = getattr(info, "vmem_capacity_bytes", None)
        if cap:
            return int(cap)
    except Exception:
        pass
    return 64 << 20  # v7x per-core (most restrictive)


# ----------------------------------------------------------------------------
# Pallas kernel: the whole noise-prediction MLP over one row-tile
# ----------------------------------------------------------------------------
def noise_pred_kernel(
    x_ref, tbcat_ref,
    # ResidualBlock 1 (x-part of in_dim weights; t-part folded into tbcat)
    r1_wcat, r1_g1, r1_be1, r1_w2, r1_b2, r1_g2, r1_be2,
    # ResidualBlock 2 (identity residual)
    r2_w1, r2_b1, r2_g1, r2_be1, r2_w2, r2_b2, r2_g2, r2_be2,
    # final Linear(2H -> E)
    wf, bfin,
    out_ref,
    *, h2_real, h2_pad,
):
    f32, bf16 = jnp.float32, jnp.bfloat16
    inv_n = 1.0 / float(h2_real)

    def ln(v, g, b):
        # Padded columns of v are exactly zero, so plain sums scaled by the
        # real feature count give the correct statistics (no mask needed).
        mu = jnp.sum(v, axis=-1, keepdims=True) * inv_n
        ex2 = jnp.sum(v * v, axis=-1, keepdims=True) * inv_n
        var = jnp.maximum(ex2 - mu * mu, 0.0)
        return (v - mu) * jax.lax.rsqrt(var + LN_EPS) * g + b

    x = x_ref[...]            # bf16 [tm, E_pad]
    tb = tbcat_ref[...]       # f32  [1 or tm, 2*H2_pad] = [t@W1_t+b1 || t@Wr_t+br]

    # --- ResidualBlock 1: fused E->2H matmul (h-path || residual-path) ---
    xt = jnp.dot(x, r1_wcat[...], preferred_element_type=f32) + tb
    h = xt[:, :h2_pad]
    res = xt[:, h2_pad:]

    h = _silu(ln(h, r1_g1[...], r1_be1[...]))
    h = jnp.dot(h.astype(bf16), r1_w2[...], preferred_element_type=f32) + r1_b2[...]
    h = ln(h, r1_g2[...], r1_be2[...])
    h = _silu(h + res)

    # --- ResidualBlock 2 (identity residual) ---
    res = h
    z = jnp.dot(h.astype(bf16), r2_w1[...], preferred_element_type=f32) + r2_b1[...]
    z = _silu(ln(z, r2_g1[...], r2_be1[...]))
    z = jnp.dot(z.astype(bf16), r2_w2[...], preferred_element_type=f32) + r2_b2[...]
    z = ln(z, r2_g2[...], r2_be2[...])
    h = _silu(z + res)

    # --- final projection (lane-dense E_pad output) ---
    out_ref[...] = (
        jnp.dot(h.astype(bf16), wf[...], preferred_element_type=f32) + bfin[...]
    ).astype(out_ref.dtype)


# ----------------------------------------------------------------------------
# parameter init (deterministic, PyTorch-Linear-style uniform(-1/sqrt(fan_in)))
# ----------------------------------------------------------------------------
def _linear_init(key, fan_in, fan_out):
    kw, kb = jax.random.split(key)
    bound = 1.0 / math.sqrt(fan_in)
    w = jax.random.uniform(kw, (fan_in, fan_out), jnp.float32, -bound, bound)
    b = jax.random.uniform(kb, (1, fan_out), jnp.float32, -bound, bound)
    return w, b


def init_params(key, esm_dim, hidden_dim):
    H, H2 = hidden_dim, 2 * hidden_dim
    in_dim = esm_dim + hidden_dim
    keys = jax.random.split(key, 8)
    p = {}
    # time_embed: Linear(H, 2H), SiLU, Linear(2H, H)
    p["t_w1"], p["t_b1"] = _linear_init(keys[0], H, H2)
    p["t_w2"], p["t_b2"] = _linear_init(keys[1], H2, H)
    # ResidualBlock 1
    p["r1_w1"], p["r1_b1"] = _linear_init(keys[2], in_dim, H2)
    p["r1_g1"], p["r1_be1"] = jnp.ones((1, H2), jnp.float32), jnp.zeros((1, H2), jnp.float32)
    p["r1_w2"], p["r1_b2"] = _linear_init(keys[3], H2, H2)
    p["r1_g2"], p["r1_be2"] = jnp.ones((1, H2), jnp.float32), jnp.zeros((1, H2), jnp.float32)
    p["r1_wr"], p["r1_br"] = _linear_init(keys[4], in_dim, H2)
    # ResidualBlock 2
    p["r2_w1"], p["r2_b1"] = _linear_init(keys[5], H2, H2)
    p["r2_g1"], p["r2_be1"] = jnp.ones((1, H2), jnp.float32), jnp.zeros((1, H2), jnp.float32)
    p["r2_w2"], p["r2_b2"] = _linear_init(keys[6], H2, H2)
    p["r2_g2"], p["r2_be2"] = jnp.ones((1, H2), jnp.float32), jnp.zeros((1, H2), jnp.float32)
    # final Linear(2H, esm_dim)
    p["wf"], p["bf"] = _linear_init(keys[7], H2, esm_dim)
    return p


# ----------------------------------------------------------------------------
# one-time weight preparation (pad / cast / split / fuse) -- reuse across calls
# ----------------------------------------------------------------------------
def prepare_params(params, esm_dim, hidden_dim):
    E, H = esm_dim, hidden_dim
    H2 = 2 * H
    E_pad = _round_up(E, LANE)
    H2_pad = _round_up(H2, LANE)
    bf16, f32 = jnp.bfloat16, jnp.float32

    def pad2(a, rows, cols, dtype):
        return jnp.pad(a, ((0, rows - a.shape[0]), (0, cols - a.shape[1]))).astype(dtype)

    # split the first residual-block weights row-wise: x-part goes in the
    # kernel, t-part (constant over seq) collapses into a per-batch bias.
    w1_x, w1_t = params["r1_w1"][:E], params["r1_w1"][E:]
    wr_x, wr_t = params["r1_wr"][:E], params["r1_wr"][E:]

    # fused E->2H weight: first half = h path (w1), second half = residual (wr)
    r1_wcat = jnp.concatenate(
        [pad2(w1_x, E_pad, H2_pad, bf16), pad2(wr_x, E_pad, H2_pad, bf16)], axis=1)

    weights = (
        r1_wcat,                                       # [E_pad, 2*H2_pad] bf16
        pad2(params["r1_g1"], 1, H2_pad, f32),
        pad2(params["r1_be1"], 1, H2_pad, f32),
        pad2(params["r1_w2"], H2_pad, H2_pad, bf16),
        pad2(params["r1_b2"], 1, H2_pad, f32),
        pad2(params["r1_g2"], 1, H2_pad, f32),
        pad2(params["r1_be2"], 1, H2_pad, f32),
        pad2(params["r2_w1"], H2_pad, H2_pad, bf16),
        pad2(params["r2_b1"], 1, H2_pad, f32),
        pad2(params["r2_g1"], 1, H2_pad, f32),
        pad2(params["r2_be1"], 1, H2_pad, f32),
        pad2(params["r2_w2"], H2_pad, H2_pad, bf16),
        pad2(params["r2_b2"], 1, H2_pad, f32),
        pad2(params["r2_g2"], 1, H2_pad, f32),
        pad2(params["r2_be2"], 1, H2_pad, f32),
        pad2(params["wf"], H2_pad, E_pad, bf16),
        pad2(params["bf"], 1, E_pad, f32),
    )
    weight_bytes = sum(int(w.size) * w.dtype.itemsize for w in weights)

    small = {  # tiny per-call pieces (time-embedding MLP + t-bias projection)
        "t_w1": params["t_w1"], "t_b1": params["t_b1"],
        "t_w2": params["t_w2"], "t_b2": params["t_b2"],
        "w1_t": w1_t, "wr_t": wr_t,
        "r1_b1": params["r1_b1"], "r1_br": params["r1_br"],
    }
    meta = dict(E=E, H=H, H2=H2, E_pad=E_pad, H2_pad=H2_pad,
                weight_bytes=weight_bytes)
    return {"weights": weights, "small": small, "meta": meta}


# ----------------------------------------------------------------------------
# forward pass
# ----------------------------------------------------------------------------
def sinusoidal_embedding(t, dim):
    half = dim // 2
    scale = math.log(10000.0) / (half - 1)
    freqs = jnp.exp(jnp.arange(half, dtype=jnp.float32) * -scale)
    emb = t.astype(jnp.float32)[:, None] * freqs[None, :]
    return jnp.concatenate([jnp.sin(emb), jnp.cos(emb)], axis=-1)  # [B, dim]


def _tile_vmem_bytes(tm, E_pad, H2_pad, out_itemsize, per_batch_tb):
    x_in = 2 * tm * E_pad * 2                              # bf16, double-buffered
    tb_rows = 1 if per_batch_tb else tm
    tb_in = 2 * tb_rows * (2 * H2_pad) * 4
    out = 2 * tm * E_pad * out_itemsize
    interm = tm * (2 * H2_pad) * 4 + 5 * tm * H2_pad * 4   # live f32 slabs (est.)
    return x_in + tb_in + out + interm


def esm_diffuser_forward(x, t, prepared, seq_tile=None, out_dtype=None):
    meta = prepared["meta"]
    sm = prepared["small"]
    weights = prepared["weights"]
    E, H, H2 = meta["E"], meta["H"], meta["H2"]
    E_pad, H2_pad = meta["E_pad"], meta["H2_pad"]
    weight_bytes = meta["weight_bytes"]
    bf16, f32 = jnp.bfloat16, jnp.float32

    B, S, E_in = x.shape
    assert E_in == E
    out_dtype = out_dtype or x.dtype
    out_isz = jnp.dtype(out_dtype).itemsize

    # ---- time-embedding MLP + fused per-batch t-bias (tiny; plain JAX) ----
    emb = sinusoidal_embedding(t, H)                               # [B, H]
    th = _silu(emb @ sm["t_w1"] + sm["t_b1"])
    t_emb = th @ sm["t_w2"] + sm["t_b2"]                           # [B, H]
    tb1 = t_emb @ sm["w1_t"] + sm["r1_b1"]                         # [B, H2]
    tbr = t_emb @ sm["wr_t"] + sm["r1_br"]                         # [B, H2]

    def padc(a):
        return jnp.pad(a, ((0, 0), (0, H2_pad - a.shape[1])))

    tbcat = jnp.concatenate([padc(tb1), padc(tbr)], axis=1).astype(f32)  # [B, 2*H2_pad]

    # ---- VMEM budget + tile size (multiple of 16 for bf16 sublane packing) ----
    vmem_cap = _vmem_capacity_bytes()
    budget = vmem_cap - (8 << 20)                       # headroom for compiler scratch
    if seq_tile is None:
        seq_tile = 512 if (budget >= (96 << 20) and S >= 1024) else 256

    per_batch_tb = S >= 128      # large-S path keeps a per-batch time bias
    if per_batch_tb:
        tm = max(16, (min(seq_tile, _round_up(S, 16)) // 16) * 16)
    else:
        # small-problem path: flatten (B, S) into one row axis
        M = B * S
        tm = max(16, (min(seq_tile, _round_up(M, 16)) // 16) * 16)

    # shrink the tile until resident weights + per-tile activations fit VMEM
    while tm > 16 and weight_bytes + _tile_vmem_bytes(tm, E_pad, H2_pad, out_isz,
                                                      per_batch_tb) > budget:
        tm = max(16, ((tm // 2) // 16) * 16)

    vmem_need = weight_bytes + _tile_vmem_bytes(tm, E_pad, H2_pad, out_isz,
                                                per_batch_tb) + (4 << 20)
    vmem_limit = int(max(min(vmem_need, budget), min(32 << 20, budget)))

    # grid-invariant weights: resident once in VMEM, not double-buffered
    vmem_full = pl.BlockSpec(memory_space=pltpu.MemorySpace.VMEM)

    if per_batch_tb:
        S_pad = pl.cdiv(S, tm) * tm
        x_op = jnp.pad(x.astype(bf16), ((0, 0), (0, S_pad - S), (0, E_pad - E)))
        tb_op = tbcat.reshape(B, 1, 2 * H2_pad)
        grid = (B, S_pad // tm)
        in_specs = [
            pl.BlockSpec((None, tm, E_pad), lambda b, s: (b, s, 0)),
            pl.BlockSpec((None, 1, 2 * H2_pad), lambda b, s: (b, 0, 0)),
        ] + [vmem_full] * len(weights)
        out_specs = pl.BlockSpec((None, tm, E_pad), lambda b, s: (b, s, 0))
        out_shape = jax.ShapeDtypeStruct((B, S_pad, E_pad), out_dtype)
        dims = ("parallel", "parallel")
        rows = B * S_pad
    else:
        M = B * S
        M_pad = pl.cdiv(M, tm) * tm
        x_op = jnp.pad(x.reshape(M, E).astype(bf16),
                       ((0, M_pad - M), (0, E_pad - E)))
        tb_rows = jnp.broadcast_to(tbcat[:, None, :],
                                   (B, S, 2 * H2_pad)).reshape(M, 2 * H2_pad)
        tb_op = jnp.pad(tb_rows, ((0, M_pad - M), (0, 0)))
        grid = (M_pad // tm,)
        in_specs = [
            pl.BlockSpec((tm, E_pad), lambda i: (i, 0)),
            pl.BlockSpec((tm, 2 * H2_pad), lambda i: (i, 0)),
        ] + [vmem_full] * len(weights)
        out_specs = pl.BlockSpec((tm, E_pad), lambda i: (i, 0))
        out_shape = jax.ShapeDtypeStruct((M_pad, E_pad), out_dtype)
        dims = ("parallel",)
        rows = M_pad

    flops = 2 * rows * (2 * E_pad * H2_pad + 3 * H2_pad * H2_pad + H2_pad * E_pad)
    bytes_accessed = (int(x_op.size) * 2 + int(tb_op.size) * 4
                      + weight_bytes + rows * E_pad * out_isz)
    cost = pl.CostEstimate(flops=int(flops),
                           transcendentals=int(rows * 4 * H2_pad),
                           bytes_accessed=int(bytes_accessed))

    out = pl.pallas_call(
        functools.partial(noise_pred_kernel, h2_real=H2, h2_pad=H2_pad),
        out_shape=out_shape,
        grid=grid,
        in_specs=in_specs,
        out_specs=out_specs,
        compiler_params=pltpu.CompilerParams(
            dimension_semantics=dims,
            vmem_limit_bytes=vmem_limit,
        ),
        cost_estimate=cost,
    )(x_op, tb_op, *weights)

    if per_batch_tb:
        return out[:, :S, :E]
    return out[:B * S].reshape(B, S, E_pad)[:, :, :E]


# ----------------------------------------------------------------------------
# references
# ----------------------------------------------------------------------------
def reference_forward(x, t, p, hidden_dim):
    """Pure-f32 mirror of the PyTorch forward (concat form)."""
    B, S, E = x.shape
    emb = sinusoidal_embedding(t, hidden_dim)
    h = _silu(emb @ p["t_w1"] + p["t_b1"])
    t_emb = h @ p["t_w2"] + p["t_b2"]
    t_emb = jnp.broadcast_to(t_emb[:, None, :], (B, S, hidden_dim))
    xt = jnp.concatenate([x.astype(jnp.float32), t_emb], axis=-1)

    res = xt @ p["r1_wr"] + p["r1_br"]
    h = _layer_norm(xt @ p["r1_w1"] + p["r1_b1"], p["r1_g1"], p["r1_be1"])
    h = _silu(h)
    h = _layer_norm(h @ p["r1_w2"] + p["r1_b2"], p["r1_g2"], p["r1_be2"])
    h = _silu(h + res)
    res = h
    z = _layer_norm(h @ p["r2_w1"] + p["r2_b1"], p["r2_g1"], p["r2_be1"])
    z = _silu(z)
    z = _layer_norm(z @ p["r2_w2"] + p["r2_b2"], p["r2_g2"], p["r2_be2"])
    h = _silu(z + res)
    return h @ p["wf"] + p["bf"]


def reference_matched(x, t, p, hidden_dim):
    """Same decomposition/precision as the kernel (bf16 MXU ops, f32 accum)."""
    B, S, E = x.shape
    emb = sinusoidal_embedding(t, hidden_dim)
    th = _silu(emb @ p["t_w1"] + p["t_b1"])
    t_emb = th @ p["t_w2"] + p["t_b2"]
    w1_x, w1_t = p["r1_w1"][:E], p["r1_w1"][E:]
    wr_x, wr_t = p["r1_wr"][:E], p["r1_wr"][E:]
    tb1 = t_emb @ w1_t + p["r1_b1"]
    tbr = t_emb @ wr_t + p["r1_br"]

    def bdot(a, w):
        return jnp.dot(a.astype(jnp.bfloat16), w.astype(jnp.bfloat16),
                       preferred_element_type=jnp.float32)

    res = bdot(x, wr_x) + tbr[:, None, :]
    h = bdot(x, w1_x) + tb1[:, None, :]
    h = _layer_norm(h, p["r1_g1"], p["r1_be1"]); h = _silu(h)
    h = bdot(h, p["r1_w2"]) + p["r1_b2"]
    h = _layer_norm(h, p["r1_g2"], p["r1_be2"]); h = _silu(h + res)
    res = h
    z = bdot(h, p["r2_w1"]) + p["r2_b1"]
    z = _layer_norm(z, p["r2_g1"], p["r2_be1"]); z = _silu(z)
    z = bdot(z, p["r2_w2"]) + p["r2_b2"]
    z = _layer_norm(z, p["r2_g2"], p["r2_be2"]); h = _silu(z + res)
    return bdot(h, p["wf"]) + p["bf"]


if __name__ == "__main__":
    B, S, E, H = 2, 8, 32, 32  # batch, seq_len, esm_dim, hidden_dim
    key = jax.random.PRNGKey(0)
    kx, kt, kp = jax.random.split(key, 3)
    x = jax.random.normal(kx, (B, S, E), dtype=jnp.float32)
    t = jax.random.randint(kt, (B,), 0, 1000)

    params = init_params(kp, E, H)
    prepared = prepare_params(params, E, H)   # one-time pad/cast/fuse

    out = esm_diffuser_forward(x, t, prepared)
    out = jax.block_until_ready(out)
    assert out.shape == (B, S, E)
    out = out.astype(jnp.float32)

    # tight check against a precision-matched reference, loose check vs pure f32
    ref_m = reference_matched(x, t, params, H)
    ref_f = reference_forward(x, t, params, H)
    assert jnp.allclose(out, ref_m, atol=2e-2, rtol=2e-2), "mismatch vs matched ref"
    assert jnp.allclose(out, ref_f, atol=2e-1, rtol=2e-1), "mismatch vs f32 ref"
    print("KERNEL_OK")
</pallas_src>

<mosaic_0001>
module attributes {stable_mosaic.version = 11 : i64} {
  func.func @noise_pred_kernel(%arg0: i32, %arg1: memref<16x128xbf16, #tpu.memory_space<vmem>>, %arg2: memref<16x256xf32, #tpu.memory_space<vmem>>, %arg3: memref<128x256xbf16, #tpu.memory_space<vmem>>, %arg4: memref<1x128xf32, #tpu.memory_space<vmem>>, %arg5: memref<1x128xf32, #tpu.memory_space<vmem>>, %arg6: memref<128x128xbf16, #tpu.memory_space<vmem>>, %arg7: memref<1x128xf32, #tpu.memory_space<vmem>>, %arg8: memref<1x128xf32, #tpu.memory_space<vmem>>, %arg9: memref<1x128xf32, #tpu.memory_space<vmem>>, %arg10: memref<128x128xbf16, #tpu.memory_space<vmem>>, %arg11: memref<1x128xf32, #tpu.memory_space<vmem>>, %arg12: memref<1x128xf32, #tpu.memory_space<vmem>>, %arg13: memref<1x128xf32, #tpu.memory_space<vmem>>, %arg14: memref<128x128xbf16, #tpu.memory_space<vmem>>, %arg15: memref<1x128xf32, #tpu.memory_space<vmem>>, %arg16: memref<1x128xf32, #tpu.memory_space<vmem>>, %arg17: memref<1x128xf32, #tpu.memory_space<vmem>>, %arg18: memref<128x128xbf16, #tpu.memory_space<vmem>>, %arg19: memref<1x128xf32, #tpu.memory_space<vmem>>, %arg20: memref<16x128xf32, #tpu.memory_space<vmem>>) attributes {dimension_semantics = [#tpu.dimension_semantics<parallel>], iteration_bounds = array<i64: 1>, scalar_prefetch = 0 : i64, scratch_operands = 0 : i64, tpu.core_type = #tpu.core_type<tc>, window_params = [{transform_indices = @transform_0, window_bounds = array<i64: 16, 128>}, {transform_indices = @transform_1, window_bounds = array<i64: 16, 256>}, {pipeline_mode = #tpu.pipeline_mode<synchronous>, transform_indices = @transform_2, window_bounds = array<i64: 128, 256>}, {pipeline_mode = #tpu.pipeline_mode<synchronous>, transform_indices = @transform_3, window_bounds = array<i64: 1, 128>}, {pipeline_mode = #tpu.pipeline_mode<synchronous>, transform_indices = @transform_4, window_bounds = array<i64: 1, 128>}, {pipeline_mode = #tpu.pipeline_mode<synchronous>, transform_indices = @transform_5, window_bounds = array<i64: 128, 128>}, {pipeline_mode = #tpu.pipeline_mode<synchronous>, transform_indices = @transform_6, window_bounds = array<i64: 1, 128>}, {pipeline_mode = #tpu.pipeline_mode<synchronous>, transform_indices = @transform_7, window_bounds = array<i64: 1, 128>}, {pipeline_mode = #tpu.pipeline_mode<synchronous>, transform_indices = @transform_8, window_bounds = array<i64: 1, 128>}, {pipeline_mode = #tpu.pipeline_mode<synchronous>, transform_indices = @transform_9, window_bounds = array<i64: 128, 128>}, {pipeline_mode = #tpu.pipeline_mode<synchronous>, transform_indices = @transform_10, window_bounds = array<i64: 1, 128>}, {pipeline_mode = #tpu.pipeline_mode<synchronous>, transform_indices = @transform_11, window_bounds = array<i64: 1, 128>}, {pipeline_mode = #tpu.pipeline_mode<synchronous>, transform_indices = @transform_12, window_bounds = array<i64: 1, 128>}, {pipeline_mode = #tpu.pipeline_mode<synchronous>, transform_indices = @transform_13, window_bounds = array<i64: 128, 128>}, {pipeline_mode = #tpu.pipeline_mode<synchronous>, transform_indices = @transform_14, window_bounds = array<i64: 1, 128>}, {pipeline_mode = #tpu.pipeline_mode<synchronous>, transform_indices = @transform_15, window_bounds = array<i64: 1, 128>}, {pipeline_mode = #tpu.pipeline_mode<synchronous>, transform_indices = @transform_16, window_bounds = array<i64: 1, 128>}, {pipeline_mode = #tpu.pipeline_mode<synchronous>, transform_indices = @transform_17, window_bounds = array<i64: 128, 128>}, {pipeline_mode = #tpu.pipeline_mode<synchronous>, transform_indices = @transform_18, window_bounds = array<i64: 1, 128>}, {transform_indices = @transform_19, window_bounds = array<i64: 16, 128>}]} {
    %c0 = arith.constant 0 : index
    %c0_0 = arith.constant 0 : index
    %0 = vector.load %arg1[%c0, %c0_0] : memref<16x128xbf16, #tpu.memory_space<vmem>>, vector<16x128xbf16>
    %c0_1 = arith.constant 0 : index
    %c0_2 = arith.constant 0 : index
    %1 = vector.load %arg2[%c0_1, %c0_2] : memref<16x256xf32, #tpu.memory_space<vmem>>, vector<16x256xf32>
    %c0_3 = arith.constant 0 : index
    %c0_4 = arith.constant 0 : index
    %2 = vector.load %arg3[%c0_3, %c0_4] : memref<128x256xbf16, #tpu.memory_space<vmem>>, vector<128x256xbf16>
    %cst = arith.constant dense<0.000000e+00> : vector<16x256xf32>
    %3 = tpu.matmul %0, %2, %cst {dimension_numbers = #tpu.dot_dimension_numbers<[1], [0], [0], [1], [0, 0, 1, 1], [], []>} : vector<16x128xbf16>, vector<128x256xbf16>, vector<16x256xf32> -> vector<16x256xf32>
    %4 = arith.addf %3, %1 : vector<16x256xf32>
    %5 = vector.extract_strided_slice %4 {offsets = [0, 0], sizes = [16, 128], strides = [1, 1]} : vector<16x256xf32> to vector<16x128xf32>
    %6 = vector.extract_strided_slice %4 {offsets = [0, 128], sizes = [16, 128], strides = [1, 1]} : vector<16x256xf32> to vector<16x128xf32>
    %c0_5 = arith.constant 0 : index
    %c0_6 = arith.constant 0 : index
    %7 = vector.load %arg4[%c0_5, %c0_6] : memref<1x128xf32, #tpu.memory_space<vmem>>, vector<1x128xf32>
    %c0_7 = arith.constant 0 : index
    %c0_8 = arith.constant 0 : index
    %8 = vector.load %arg5[%c0_7, %c0_8] : memref<1x128xf32, #tpu.memory_space<vmem>>, vector<1x128xf32>
    %cst_9 = arith.constant dense<0.000000e+00> : vector<16xf32>
    %9 = vector.multi_reduction <add>, %5, %cst_9 [1] : vector<16x128xf32> to vector<16xf32>
    %10 = vector.shape_cast %9 : vector<16xf32> to vector<16x1xf32>
    %cst_10 = arith.constant 1.562500e-02 : f32
    %11 = vector.broadcast %cst_10 : f32 to vector<16x1xf32>
    %12 = arith.mulf %10, %11 : vector<16x1xf32>
    %13 = arith.mulf %5, %5 : vector<16x128xf32>
    %cst_11 = arith.constant dense<0.000000e+00> : vector<16xf32>
    %14 = vector.multi_reduction <add>, %13, %cst_11 [1] : vector<16x128xf32> to vector<16xf32>
    %15 = vector.shape_cast %14 : vector<16xf32> to vector<16x1xf32>
    %cst_12 = arith.constant 1.562500e-02 : f32
    %16 = vector.broadcast %cst_12 : f32 to vector<16x1xf32>
    %17 = arith.mulf %15, %16 : vector<16x1xf32>
    %18 = arith.mulf %12, %12 : vector<16x1xf32>
    %19 = arith.subf %17, %18 : vector<16x1xf32>
    %cst_13 = arith.constant 0.000000e+00 : f32
    %20 = vector.broadcast %cst_13 : f32 to vector<16x1xf32>
    %21 = arith.maximumf %19, %20 : vector<16x1xf32>
    %22 = vector.broadcast %12 : vector<16x1xf32> to vector<16x128xf32>
    %23 = arith.subf %5, %22 : vector<16x128xf32>
    %cst_14 = arith.constant 9.99999974E-6 : f32
    %24 = vector.broadcast %cst_14 : f32 to vector<16x1xf32>
    %25 = arith.addf %21, %24 : vector<16x1xf32>
    %26 = math.rsqrt %25 : vector<16x1xf32>
    %27 = vector.broadcast %26 : vector<16x1xf32> to vector<16x128xf32>
    %28 = arith.mulf %23, %27 : vector<16x128xf32>
    %29 = vector.broadcast %7 : vector<1x128xf32> to vector<16x128xf32>
    %30 = arith.mulf %28, %29 : vector<16x128xf32>
    %31 = vector.broadcast %8 : vector<1x128xf32> to vector<16x128xf32>
    %32 = arith.addf %30, %31 : vector<16x128xf32>
    %33 = arith.negf %32 : vector<16x128xf32>
    %34 = math.exp %33 : vector<16x128xf32>
    %cst_15 = arith.constant 1.000000e+00 : f32
    %35 = vector.broadcast %cst_15 : f32 to vector<16x128xf32>
    %36 = arith.addf %35, %34 : vector<16x128xf32>
    %37 = arith.divf %35, %36 : vector<16x128xf32>
    %38 = arith.mulf %32, %37 : vector<16x128xf32>
    %39 = arith.truncf %38 : vector<16x128xf32> to vector<16x128xbf16>
    %c0_16 = arith.constant 0 : index
    %c0_17 = arith.constant 0 : index
    %40 = vector.load %arg6[%c0_16, %c0_17] : memref<128x128xbf16, #tpu.memory_space<vmem>>, vector<128x128xbf16>
    %cst_18 = arith.constant dense<0.000000e+00> : vector<16x128xf32>
    %41 = tpu.matmul %39, %40, %cst_18 {dimension_numbers = #tpu.dot_dimension_numbers<[1], [0], [0], [1], [0, 0, 1, 1], [], []>} : vector<16x128xbf16>, vector<128x128xbf16>, vector<16x128xf32> -> vector<16x128xf32>
    %c0_19 = arith.constant 0 : index
    %c0_20 = arith.constant 0 : index
    %42 = vector.load %arg7[%c0_19, %c0_20] : memref<1x128xf32, #tpu.memory_space<vmem>>, vector<1x128xf32>
    %43 = vector.broadcast %42 : vector<1x128xf32> to vector<16x128xf32>
    %44 = arith.addf %41, %43 : vector<16x128xf32>
    %c0_21 = arith.constant 0 : index
    %c0_22 = arith.constant 0 : index
    %45 = vector.load %arg8[%c0_21, %c0_22] : memref<1x128xf32, #tpu.memory_space<vmem>>, vector<1x128xf32>
    %c0_23 = arith.constant 0 : index
    %c0_24 = arith.constant 0 : index
    %46 = vector.load %arg9[%c0_23, %c0_24] : memref<1x128xf32, #tpu.memory_space<vmem>>, vector<1x128xf32>
    %cst_25 = arith.constant dense<0.000000e+00> : vector<16xf32>
    %47 = vector.multi_reduction <add>, %44, %cst_25 [1] : vector<16x128xf32> to vector<16xf32>
    %48 = vector.shape_cast %47 : vector<16xf32> to vector<16x1xf32>
    %cst_26 = arith.constant 1.562500e-02 : f32
    %49 = vector.broadcast %cst_26 : f32 to vector<16x1xf32>
    %50 = arith.mulf %48, %49 : vector<16x1xf32>
    %51 = arith.mulf %44, %44 : vector<16x128xf32>
    %cst_27 = arith.constant dense<0.000000e+00> : vector<16xf32>
    %52 = vector.multi_reduction <add>, %51, %cst_27 [1] : vector<16x128xf32> to vector<16xf32>
    %53 = vector.shape_cast %52 : vector<16xf32> to vector<16x1xf32>
    %cst_28 = arith.constant 1.562500e-02 : f32
    %54 = vector.broadcast %cst_28 : f32 to vector<16x1xf32>
    %55 = arith.mulf %53, %54 : vector<16x1xf32>
    %56 = arith.mulf %50, %50 : vector<16x1xf32>
    %57 = arith.subf %55, %56 : vector<16x1xf32>
    %cst_29 = arith.constant 0.000000e+00 : f32
    %58 = vector.broadcast %cst_29 : f32 to vector<16x1xf32>
    %59 = arith.maximumf %57, %58 : vector<16x1xf32>
    %60 = vector.broadcast %50 : vector<16x1xf32> to vector<16x128xf32>
    %61 = arith.subf %44, %60 : vector<16x128xf32>
    %cst_30 = arith.constant 9.99999974E-6 : f32
    %62 = vector.broadcast %cst_30 : f32 to vector<16x1xf32>
    %63 = arith.addf %59, %62 : vector<16x1xf32>
    %64 = math.rsqrt %63 : vector<16x1xf32>
    %65 = vector.broadcast %64 : vector<16x1xf32> to vector<16x128xf32>
    %66 = arith.mulf %61, %65 : vector<16x128xf32>
    %67 = vector.broadcast %45 : vector<1x128xf32> to vector<16x128xf32>
    %68 = arith.mulf %66, %67 : vector<16x128xf32>
    %69 = vector.broadcast %46 : vector<1x128xf32> to vector<16x128xf32>
    %70 = arith.addf %68, %69 : vector<16x128xf32>
    %71 = arith.addf %70, %6 : vector<16x128xf32>
    %72 = arith.negf %71 : vector<16x128xf32>
    %73 = math.exp %72 : vector<16x128xf32>
    %cst_31 = arith.constant 1.000000e+00 : f32
    %74 = vector.broadcast %cst_31 : f32 to vector<16x128xf32>
    %75 = arith.addf %74, %73 : vector<16x128xf32>
    %76 = arith.divf %74, %75 : vector<16x128xf32>
    %77 = arith.mulf %71, %76 : vector<16x128xf32>
    %78 = arith.truncf %77 : vector<16x128xf32> to vector<16x128xbf16>
    %c0_32 = arith.constant 0 : index
    %c0_33 = arith.constant 0 : index
    %79 = vector.load %arg10[%c0_32, %c0_33] : memref<128x128xbf16, #tpu.memory_space<vmem>>, vector<128x128xbf16>
    %cst_34 = arith.constant dense<0.000000e+00> : vector<16x128xf32>
    %80 = tpu.matmul %78, %79, %cst_34 {dimension_numbers = #tpu.dot_dimension_numbers<[1], [0], [0], [1], [0, 0, 1, 1], [], []>} : vector<16x128xbf16>, vector<128x128xbf16>, vector<16x128xf32> -> vector<16x128xf32>
    %c0_35 = arith.constant 0 : index
    %c0_36 = arith.constant 0 : index
    %81 = vector.load %arg11[%c0_35, %c0_36] : memref<1x128xf32, #tpu.memory_space<vmem>>, vector<1x128xf32>
    %82 = vector.broadcast %81 : vector<1x128xf32> to vector<16x128xf32>
    %83 = arith.addf %80, %82 : vector<16x128xf32>
    %c0_37 = arith.constant 0 : index
    %c0_38 = arith.constant 0 : index
    %84 = vector.load %arg12[%c0_37, %c0_38] : memref<1x128xf32, #tpu.memory_space<vmem>>, vector<1x128xf32>
    %c0_39 = arith.constant 0 : index
    %c0_40 = arith.constant 0 : index
    %85 = vector.load %arg13[%c0_39, %c0_40] : memref<1x128xf32, #tpu.memory_space<vmem>>, vector<1x128xf32>
    %cst_41 = arith.constant dense<0.000000e+00> : vector<16xf32>
    %86 = vector.multi_reduction <add>, %83, %cst_41 [1] : vector<16x128xf32> to vector<16xf32>
    %87 = vector.shape_cast %86 : vector<16xf32> to vector<16x1xf32>
    %cst_42 = arith.constant 1.562500e-02 : f32
    %88 = vector.broadcast %cst_42 : f32 to vector<16x1xf32>
    %89 = arith.mulf %87, %88 : vector<16x1xf32>
    %90 = arith.mulf %83, %83 : vector<16x128xf32>
    %cst_43 = arith.constant dense<0.000000e+00> : vector<16xf32>
    %91 = vector.multi_reduction <add>, %90, %cst_43 [1] : vector<16x128xf32> to vector<16xf32>
    %92 = vector.shape_cast %91 : vector<16xf32> to vector<16x1xf32>
    %cst_44 = arith.constant 1.562500e-02 : f32
    %93 = vector.broadcast %cst_44 : f32 to vector<16x1xf32>
    %94 = arith.mulf %92, %93 : vector<16x1xf32>
    %95 = arith.mulf %89, %89 : vector<16x1xf32>
    %96 = arith.subf %94, %95 : vector<16x1xf32>
    %cst_45 = arith.constant 0.000000e+00 : f32
    %97 = vector.broadcast %cst_45 : f32 to vector<16x1xf32>
    %98 = arith.maximumf %96, %97 : vector<16x1xf32>
    %99 = vector.broadcast %89 : vector<16x1xf32> to vector<16x128xf32>
    %100 = arith.subf %83, %99 : vector<16x128xf32>
    %cst_46 = arith.constant 9.99999974E-6 : f32
    %101 = vector.broadcast %cst_46 : f32 to vector<16x1xf32>
    %102 = arith.addf %98, %101 : vector<16x1xf32>
    %103 = math.rsqrt %102 : vector<16x1xf32>
    %104 = vector.broadcast %103 : vector<16x1xf32> to vector<16x128xf32>
    %105 = arith.mulf %100, %104 : vector<16x128xf32>
    %106 = vector.broadcast %84 : vector<1x128xf32> to vector<16x128xf32>
    %107 = arith.mulf %105, %106 : vector<16x128xf32>
    %108 = vector.broadcast %85 : vector<1x128xf32> to vector<16x128xf32>
    %109 = arith.addf %107, %108 : vector<16x128xf32>
    %110 = arith.negf %109 : vector<16x128xf32>
    %111 = math.exp %110 : vector<16x128xf32>
    %cst_47 = arith.constant 1.000000e+00 : f32
    %112 = vector.broadcast %cst_47 : f32 to vector<16x128xf32>
    %113 = arith.addf %112, %111 : vector<16x128xf32>
    %114 = arith.divf %112, %113 : vector<16x128xf32>
    %115 = arith.mulf %109, %114 : vector<16x128xf32>
    %116 = arith.truncf %115 : vector<16x128xf32> to vector<16x128xbf16>
    %c0_48 = arith.constant 0 : index
    %c0_49 = arith.constant 0 : index
    %117 = vector.load %arg14[%c0_48, %c0_49] : memref<128x128xbf16, #tpu.memory_space<vmem>>, vector<128x128xbf16>
    %cst_50 = arith.constant dense<0.000000e+00> : vector<16x128xf32>
    %118 = tpu.matmul %116, %117, %cst_50 {dimension_numbers = #tpu.dot_dimension_numbers<[1], [0], [0], [1], [0, 0, 1, 1], [], []>} : vector<16x128xbf16>, vector<128x128xbf16>, vector<16x128xf32> -> vector<16x128xf32>
    %c0_51 = arith.constant 0 : index
    %c0_52 = arith.constant 0 : index
    %119 = vector.load %arg15[%c0_51, %c0_52] : memref<1x128xf32, #tpu.memory_space<vmem>>, vector<1x128xf32>
    %120 = vector.broadcast %119 : vector<1x128xf32> to vector<16x128xf32>
    %121 = arith.addf %118, %120 : vector<16x128xf32>
    %c0_53 = arith.constant 0 : index
    %c0_54 = arith.constant 0 : index
    %122 = vector.load %arg16[%c0_53, %c0_54] : memref<1x128xf32, #tpu.memory_space<vmem>>, vector<1x128xf32>
    %c0_55 = arith.constant 0 : index
    %c0_56 = arith.constant 0 : index
    %123 = vector.load %arg17[%c0_55, %c0_56] : memref<1x128xf32, #tpu.memory_space<vmem>>, vector<1x128xf32>
    %cst_57 = arith.constant dense<0.000000e+00> : vector<16xf32>
    %124 = vector.multi_reduction <add>, %121, %cst_57 [1] : vector<16x128xf32> to vector<16xf32>
    %125 = vector.shape_cast %124 : vector<16xf32> to vector<16x1xf32>
    %cst_58 = arith.constant 1.562500e-02 : f32
    %126 = vector.broadcast %cst_58 : f32 to vector<16x1xf32>
    %127 = arith.mulf %125, %126 : vector<16x1xf32>
    %128 = arith.mulf %121, %121 : vector<16x128xf32>
    %cst_59 = arith.constant dense<0.000000e+00> : vector<16xf32>
    %129 = vector.multi_reduction <add>, %128, %cst_59 [1] : vector<16x128xf32> to vector<16xf32>
    %130 = vector.shape_cast %129 : vector<16xf32> to vector<16x1xf32>
    %cst_60 = arith.constant 1.562500e-02 : f32
    %131 = vector.broadcast %cst_60 : f32 to vector<16x1xf32>
    %132 = arith.mulf %130, %131 : vector<16x1xf32>
    %133 = arith.mulf %127, %127 : vector<16x1xf32>
    %134 = arith.subf %132, %133 : vector<16x1xf32>
    %cst_61 = arith.constant 0.000000e+00 : f32
    %135 = vector.broadcast %cst_61 : f32 to vector<16x1xf32>
    %136 = arith.maximumf %134, %135 : vector<16x1xf32>
    %137 = vector.broadcast %127 : vector<16x1xf32> to vector<16x128xf32>
    %138 = arith.subf %121, %137 : vector<16x128xf32>
    %cst_62 = arith.constant 9.99999974E-6 : f32
    %139 = vector.broadcast %cst_62 : f32 to vector<16x1xf32>
    %140 = arith.addf %136, %139 : vector<16x1xf32>
    %141 = math.rsqrt %140 : vector<16x1xf32>
    %142 = vector.broadcast %141 : vector<16x1xf32> to vector<16x128xf32>
    %143 = arith.mulf %138, %142 : vector<16x128xf32>
    %144 = vector.broadcast %122 : vector<1x128xf32> to vector<16x128xf32>
    %145 = arith.mulf %143, %144 : vector<16x128xf32>
    %146 = vector.broadcast %123 : vector<1x128xf32> to vector<16x128xf32>
    %147 = arith.addf %145, %146 : vector<16x128xf32>
    %148 = arith.addf %147, %77 : vector<16x128xf32>
    %149 = arith.negf %148 : vector<16x128xf32>
    %150 = math.exp %149 : vector<16x128xf32>
    %cst_63 = arith.constant 1.000000e+00 : f32
    %151 = vector.broadcast %cst_63 : f32 to vector<16x128xf32>
    %152 = arith.addf %151, %150 : vector<16x128xf32>
    %153 = arith.divf %151, %152 : vector<16x128xf32>
    %154 = arith.mulf %148, %153 : vector<16x128xf32>
    %155 = arith.truncf %154 : vector<16x128xf32> to vector<16x128xbf16>
    %c0_64 = arith.constant 0 : index
    %c0_65 = arith.constant 0 : index
    %156 = vector.load %arg18[%c0_64, %c0_65] : memref<128x128xbf16, #tpu.memory_space<vmem>>, vector<128x128xbf16>
    %cst_66 = arith.constant dense<0.000000e+00> : vector<16x128xf32>
    %157 = tpu.matmul %155, %156, %cst_66 {dimension_numbers = #tpu.dot_dimension_numbers<[1], [0], [0], [1], [0, 0, 1, 1], [], []>} : vector<16x128xbf16>, vector<128x128xbf16>, vector<16x128xf32> -> vector<16x128xf32>
    %c0_67 = arith.constant 0 : index
    %c0_68 = arith.constant 0 : index
    %158 = vector.load %arg19[%c0_67, %c0_68] : memref<1x128xf32, #tpu.memory_space<vmem>>, vector<1x128xf32>
    %159 = vector.broadcast %158 : vector<1x128xf32> to vector<16x128xf32>
    %160 = arith.addf %157, %159 : vector<16x128xf32>
    %c0_69 = arith.constant 0 : index
    %c0_70 = arith.constant 0 : index
    %161 = vector.load %arg20[%c0_69, %c0_70] : memref<16x128xf32, #tpu.memory_space<vmem>>, vector<16x128xf32>
    tpu.vector_store %arg20[%c0_69, %c0_70], %160 {strides = array<i32>} : memref<16x128xf32, #tpu.memory_space<vmem>>, vector<16x128xf32>,
    return
  }
  func.func @transform_0(%arg0: i32) -> (i32, i32) {
    %c0_i32 = arith.constant 0 : i32
    %c0_i32_0 = arith.constant 0 : i32
    return %arg0, %c0_i32 : i32, i32
  }
  func.func @transform_1(%arg0: i32) -> (i32, i32) {
    %c0_i32 = arith.constant 0 : i32
    %c0_i32_0 = arith.constant 0 : i32
    return %arg0, %c0_i32 : i32, i32
  }
  func.func @transform_2(%arg0: i32) -> (i32, i32) {
    %c0_i32 = arith.constant 0 : i32
    %c0_i32_0 = arith.constant 0 : i32
    %c0_i32_1 = arith.constant 0 : i32
    return %c0_i32, %c0_i32_0 : i32, i32
  }
  func.func @transform_3(%arg0: i32) -> (i32, i32) {
    %c0_i32 = arith.constant 0 : i32
    %c0_i32_0 = arith.constant 0 : i32
    %c0_i32_1 = arith.constant 0 : i32
    return %c0_i32, %c0_i32_0 : i32, i32
  }
  func.func @transform_4(%arg0: i32) -> (i32, i32) {
    %c0_i32 = arith.constant 0 : i32
    %c0_i32_0 = arith.constant 0 : i32
    %c0_i32_1 = arith.constant 0 : i32
    return %c0_i32, %c0_i32_0 : i32, i32
  }
  func.func @transform_5(%arg0: i32) -> (i32, i32) {
    %c0_i32 = arith.constant 0 : i32
    %c0_i32_0 = arith.constant 0 : i32
    %c0_i32_1 = arith.constant 0 : i32
    return %c0_i32, %c0_i32_0 : i32, i32
  }
  func.func @transform_6(%arg0: i32) -> (i32, i32) {
    %c0_i32 = arith.constant 0 : i32
    %c0_i32_0 = arith.constant 0 : i32
    %c0_i32_1 = arith.constant 0 : i32
    return %c0_i32, %c0_i32_0 : i32, i32
  }
  func.func @transform_7(%arg0: i32) -> (i32, i32) {
    %c0_i32 = arith.constant 0 : i32
    %c0_i32_0 = arith.constant 0 : i32
    %c0_i32_1 = arith.constant 0 : i32
    return %c0_i32, %c0_i32_0 : i32, i32
  }
  func.func @transform_8(%arg0: i32) -> (i32, i32) {
    %c0_i32 = arith.constant 0 : i32
    %c0_i32_0 = arith.constant 0 : i32
    %c0_i32_1 = arith.constant 0 : i32
    return %c0_i32, %c0_i32_0 : i32, i32
  }
  func.func @transform_9(%arg0: i32) -> (i32, i32) {
    %c0_i32 = arith.constant 0 : i32
    %c0_i32_0 = arith.constant 0 : i32
    %c0_i32_1 = arith.constant 0 : i32
    return %c0_i32, %c0_i32_0 : i32, i32
  }
  func.func @transform_10(%arg0: i32) -> (i32, i32) {
    %c0_i32 = arith.constant 0 : i32
    %c0_i32_0 = arith.constant 0 : i32
    %c0_i32_1 = arith.constant 0 : i32
    return %c0_i32, %c0_i32_0 : i32, i32
  }
  func.func @transform_11(%arg0: i32) -> (i32, i32) {
    %c0_i32 = arith.constant 0 : i32
    %c0_i32_0 = arith.constant 0 : i32
    %c0_i32_1 = arith.constant 0 : i32
    return %c0_i32, %c0_i32_0 : i32, i32
  }
  func.func @transform_12(%arg0: i32) -> (i32, i32) {
    %c0_i32 = arith.constant 0 : i32
    %c0_i32_0 = arith.constant 0 : i32
    %c0_i32_1 = arith.constant 0 : i32
    return %c0_i32, %c0_i32_0 : i32, i32
  }
  func.func @transform_13(%arg0: i32) -> (i32, i32) {
    %c0_i32 = arith.constant 0 : i32
    %c0_i32_0 = arith.constant 0 : i32
    %c0_i32_1 = arith.constant 0 : i32
    return %c0_i32, %c0_i32_0 : i32, i32
  }
  func.func @transform_14(%arg0: i32) -> (i32, i32) {
    %c0_i32 = arith.constant 0 : i32
    %c0_i32_0 = arith.constant 0 : i32
    %c0_i32_1 = arith.constant 0 : i32
    return %c0_i32, %c0_i32_0 : i32, i32
  }
  func.func @transform_15(%arg0: i32) -> (i32, i32) {
    %c0_i32 = arith.constant 0 : i32
    %c0_i32_0 = arith.constant 0 : i32
    %c0_i32_1 = arith.constant 0 : i32
    return %c0_i32, %c0_i32_0 : i32, i32
  }
  func.func @transform_16(%arg0: i32) -> (i32, i32) {
    %c0_i32 = arith.constant 0 : i32
    %c0_i32_0 = arith.constant 0 : i32
    %c0_i32_1 = arith.constant 0 : i32
    return %c0_i32, %c0_i32_0 : i32, i32
  }
  func.func @transform_17(%arg0: i32) -> (i32, i32) {
    %c0_i32 = arith.constant 0 : i32
    %c0_i32_0 = arith.constant 0 : i32
    %c0_i32_1 = arith.constant 0 : i32
    return %c0_i32, %c0_i32_0 : i32, i32
  }
  func.func @transform_18(%arg0: i32) -> (i32, i32) {
    %c0_i32 = arith.constant 0 : i32
    %c0_i32_0 = arith.constant 0 : i32
    %c0_i32_1 = arith.constant 0 : i32
    return %c0_i32, %c0_i32_0 : i32, i32
  }
  func.func @transform_19(%arg0: i32) -> (i32, i32) {
    %c0_i32 = arith.constant 0 : i32
    %c0_i32_0 = arith.constant 0 : i32
    return %arg0, %c0_i32 : i32, i32
  }
}

</mosaic_0001>

<llo_original>
// kernel: tpu_custom_call.1
$region0: #{tpu_custom_call.1}
  #allocation0 [shape = 'u32[]', space=smem, size = 0x4, offset = 0x4, fixed_abs, tag = 'smem constant byte address 0x4 - core index']
  #allocation1 [shape = 'u32[144,128]{1,0:T(1,128)}', space=vmem, size = 0x12000, scoped, tag = 'internal scratch']
  %s0 = inlined_call_operand.hbm [shape: bf16[16,128], index: 0, kind: input, shape index: {}]
  %s1 = inlined_call_operand.hbm [shape: f32[16,256], index: 1, kind: input, shape index: {}]
  %s2 = inlined_call_operand.hbm [shape: bf16[128,256], index: 2, kind: input, shape index: {}]
  %s3 = inlined_call_operand.hbm [shape: f32[1,128], index: 3, kind: input, shape index: {}]
  %s4 = inlined_call_operand.hbm [shape: f32[1,128], index: 4, kind: input, shape index: {}]
  %s5 = inlined_call_operand.hbm [shape: bf16[128,128], index: 5, kind: input, shape index: {}]
  %s6 = inlined_call_operand.hbm [shape: f32[1,128], index: 6, kind: input, shape index: {}]
  %s7 = inlined_call_operand.hbm [shape: f32[1,128], index: 7, kind: input, shape index: {}]
  %s8 = inlined_call_operand.hbm [shape: f32[1,128], index: 8, kind: input, shape index: {}]
  %s9 = inlined_call_operand.hbm [shape: bf16[128,128], index: 9, kind: input, shape index: {}]
  %s10 = inlined_call_operand.hbm [shape: f32[1,128], index: 10, kind: input, shape index: {}]
  %s11 = inlined_call_operand.hbm [shape: f32[1,128], index: 11, kind: input, shape index: {}]
  %s12 = inlined_call_operand.hbm [shape: f32[1,128], index: 12, kind: input, shape index: {}]
  %s13 = inlined_call_operand.hbm [shape: bf16[128,128], index: 13, kind: input, shape index: {}]
  %s14 = inlined_call_operand.hbm [shape: f32[1,128], index: 14, kind: input, shape index: {}]
  %s15 = inlined_call_operand.hbm [shape: f32[1,128], index: 15, kind: input, shape index: {}]
  %s16 = inlined_call_operand.hbm [shape: f32[1,128], index: 16, kind: input, shape index: {}]
  %s17 = inlined_call_operand.vmem [shape: bf16[128,128], index: 17, kind: input, shape index: {}]
  %s18 = inlined_call_operand.vmem [shape: f32[1,128], index: 18, kind: input, shape index: {}]
  %s19 = inlined_call_operand.hbm [shape: f32[16,128], index: 19, kind: output, shape index: {}]
  %s20 = sld [smem:[#allocation0]]
  $region154: #{tpu_custom_call.1} parent=0
    _
  %s22 = ssub.s32 1, %s20
  %s23 = scalar_select 0, %s22, %s20
  $region1: #{tpu_custom_call.1} parent=0
    #allocation2 [shape = 'u8[4096]{0}', space=vmem, size = 0x1000, scoped, tag = 'input window, operand 0, single buffered']
    #allocation3 [shape = 's32[1]{0}', space=sflag, size = 0x4, scoped, tag = 'scoped memory for tpu_custom_call.1']
    #allocation4 [shape = 's32[1]{0}', space=sflag, size = 0x4, scoped, tag = 'scoped memory for tpu_custom_call.1']
    #allocation5 [shape = 'u8[16384]{0}', space=vmem, size = 0x4000, scoped, tag = 'input window, operand 1, single buffered']
    #allocation6 [shape = 's32[1]{0}', space=sflag, size = 0x4, scoped, tag = 'scoped memory for tpu_custom_call.1']
    #allocation7 [shape = 'u8[65536]{0}', space=vmem, size = 0x10000, scoped, tag = 'input window, operand 2, single buffered']
    #allocation8 [shape = 'u8[512]{0}', space=vmem, size = 0x400, scoped, tag = 'input window, operand 3, single buffered']
    #allocation9 [shape = 's32[1]{0}', space=sflag, size = 0x4, scoped, tag = 'scoped memory for tpu_custom_call.1']
    #allocation10 [shape = 'u8[512]{0}', space=vmem, size = 0x400, scoped, tag = 'input window, operand 4, single buffered']
    #allocation11 [shape = 'u8[32768]{0}', space=vmem, size = 0x8000, scoped, tag = 'input window, operand 5, single buffered']
    #allocation12 [shape = 's32[1]{0}', space=sflag, size = 0x4, scoped, tag = 'scoped memory for tpu_custom_call.1']
    #allocation13 [shape = 'u8[512]{0}', space=vmem, size = 0x400, scoped, tag = 'input window, operand 6, single buffered']
    #allocation14 [shape = 'u8[512]{0}', space=vmem, size = 0x400, scoped, tag = 'input window, operand 7, single buffered']
    #allocation15 [shape = 's32[1]{0}', space=sflag, size = 0x4, scoped, tag = 'scoped memory for tpu_custom_call.1']
    #allocation16 [shape = 'u8[512]{0}', space=vmem, size = 0x400, scoped, tag = 'input window, operand 8, single buffered']
    #allocation17 [shape = 'u8[32768]{0}', space=vmem, size = 0x8000, scoped, tag = 'input window, operand 9, single buffered']
    #allocation18 [shape = 's32[1]{0}', space=sflag, size = 0x4, scoped, tag = 'scoped memory for tpu_custom_call.1']
    #allocation19 [shape = 'u8[512]{0}', space=vmem, size = 0x400, scoped, tag = 'input window, operand 10, single buffered']
    #allocation20 [shape = 'u8[512]{0}', space=vmem, size = 0x400, scoped, tag = 'input window, operand 11, single buffered']
    #allocation21 [shape = 's32[1]{0}', space=sflag, size = 0x4, scoped, tag = 'scoped memory for tpu_custom_call.1']
    #allocation22 [shape = 'u8[512]{0}', space=vmem, size = 0x400, scoped, tag = 'input window, operand 12, single buffered']
    #allocation23 [shape = 'u8[32768]{0}', space=vmem, size = 0x8000, scoped, tag = 'input window, operand 13, single buffered']
    #allocation24 [shape = 's32[1]{0}', space=sflag, size = 0x4, scoped, tag = 'scoped memory for tpu_custom_call.1']
    #allocation25 [shape = 'u8[512]{0}', space=vmem, size = 0x400, scoped, tag = 'input window, operand 14, single buffered']
    #allocation26 [shape = 'u8[512]{0}', space=vmem, size = 0x400, scoped, tag = 'input window, operand 15, single buffered']
    #allocation27 [shape = 's32[1]{0}', space=sflag, size = 0x4, scoped, tag = 'scoped memory for tpu_custom_call.1']
    #allocation28 [shape = 'u8[512]{0}', space=vmem, size = 0x400, scoped, tag = 'input window, operand 16, single buffered']
    #allocation29 [shape = 'u8[8192]{0}', space=vmem, size = 0x2000, scoped, tag = 'output window, operand 0, single buffered']
    %24 = vsyncpa [#allocation3], 0
    %25 = vsyncpa [#allocation6], 0
    %26 = vsyncpa [#allocation9], 0
    %27 = vsyncpa [#allocation12], 0
    %28 = vsyncpa [#allocation15], 0
    %29 = vsyncpa [#allocation18], 0
    %30 = vsyncpa [#allocation21], 0
    %31 = vsyncpa [#allocation24], 0
    %32 = vsyncpa [#allocation27], 0
    %33 = vsyncpa [#allocation4], 0
    // Predicated region
    $region2: #{tpu_custom_call.1} parent=1 // pred_check
      _
    $region3: #{tpu_custom_call.1} parent=1 // pred_check_branch
      %35 = sbr.rel (0) target = $region5
    $region4: #{tpu_custom_call.1} parent=1 // pred_region
      %s37 = ssub.s32 128, 128
      %38 = vsyncadd [#allocation3], %s37
      %s39 = sshll.u32 [#allocation2], 4
      %s40 = int_to_ptr.vmem [resolvable:$true] %s39
      %45 = dma.hbm_to_vmem [thread:$0]  %s0, 128, %s40, [#allocation3], 64, 64, 4
    $region5: #{tpu_custom_call.1} parent=1 // pred_fallthru
      _
    // Predicated region
    $region6: #{tpu_custom_call.1} parent=1 // pred_check
      _
    $region7: #{tpu_custom_call.1} parent=1 // pred_check_branch
      %47 = sbr.rel (0) target = $region9
    $region8: #{tpu_custom_call.1} parent=1 // pred_region
      %s49 = ssub.s32 512, 512
      %50 = vsyncadd [#allocation6], %s49
      %s51 = sshll.u32 [#allocation5], 4
      %s52 = int_to_ptr.vmem [resolvable:$true] %s51
      %57 = dma.hbm_to_vmem [thread:$0]  %s1, 512, %s52, [#allocation6], 256, 256, 16
    $region9: #{tpu_custom_call.1} parent=1 // pred_fallthru
      _
    // Predicated region
    $region10: #{tpu_custom_call.1} parent=1 // pred_check
      _
    $region11: #{tpu_custom_call.1} parent=1 // pred_check_branch
      %59 = sbr.rel (0) target = $region13
    $region12: #{tpu_custom_call.1} parent=1 // pred_region
      %s61 = ssub.s32 2048, 2048
      %62 = vsyncadd [#allocation6], %s61
      %s63 = sshll.u32 [#allocation7], 4
      %s64 = int_to_ptr.vmem [resolvable:$true] %s63
      %69 = dma.hbm_to_vmem [thread:$0]  %s2, 2048, %s64, [#allocation6], 128, 128, 8
    $region13: #{tpu_custom_call.1} parent=1 // pred_fallthru
      _
    // Predicated region
    $region14: #{tpu_custom_call.1} parent=1 // pred_check
      _
    $region15: #{tpu_custom_call.1} parent=1 // pred_check_branch
      %71 = sbr.rel (0) target = $region17
    $region16: #{tpu_custom_call.1} parent=1 // pred_region
      %s73 = ssub.s32 16, 16
      %74 = vsyncadd [#allocation9], %s73
      %s76 = sshll.u32 [#allocation8], 4
      %s77 = int_to_ptr.vmem [resolvable:$true] %s76
      %79 = dma.hbm_to_vmem [thread:$0]  %s3, 16, %s77, [#allocation9]
    $region17: #{tpu_custom_call.1} parent=1 // pred_fallthru
      _
    // Predicated region
    $region18: #{tpu_custom_call.1} parent=1 // pred_check
      _
    $region19: #{tpu_custom_call.1} parent=1 // pred_check_branch
      %81 = sbr.rel (0) target = $region21
    $region20: #{tpu_custom_call.1} parent=1 // pred_region
      %s83 = ssub.s32 16, 16
      %84 = vsyncadd [#allocation9], %s83
      %s86 = sshll.u32 [#allocation10], 4
      %s87 = int_to_ptr.vmem [resolvable:$true] %s86
      %89 = dma.hbm_to_vmem [thread:$0]  %s4, 16, %s87, [#allocation9]
    $region21: #{tpu_custom_call.1} parent=1 // pred_fallthru
      _
    // Predicated region
    $region22: #{tpu_custom_call.1} parent=1 // pred_check
      _
    $region23: #{tpu_custom_call.1} parent=1 // pred_check_branch
      %91 = sbr.rel (0) target = $region25
    $region24: #{tpu_custom_call.1} parent=1 // pred_region
      %s93 = ssub.s32 1024, 1024
      %94 = vsyncadd [#allocation12], %s93
      %s95 = sshll.u32 [#allocation11], 4
      %s96 = int_to_ptr.vmem [resolvable:$true] %s95
      %101 = dma.hbm_to_vmem [thread:$0]  %s5, 1024, %s96, [#allocation12], 64, 64, 4
    $region25: #{tpu_custom_call.1} parent=1 // pred_fallthru
      _
    // Predicated region
    $region26: #{tpu_custom_call.1} parent=1 // pred_check
      _
    $region27: #{tpu_custom_call.1} parent=1 // pred_check_branch
      %103 = sbr.rel (0) target = $region29
    $region28: #{tpu_custom_call.1} parent=1 // pred_region
      %s105 = ssub.s32 16, 16
      %106 = vsyncadd [#allocation12], %s105
      %s108 = sshll.u32 [#allocation13], 4
      %s109 = int_to_ptr.vmem [resolvable:$true] %s108
      %111 = dma.hbm_to_vmem [thread:$0]  %s6, 16, %s109, [#allocation12]
    $region29: #{tpu_custom_call.1} parent=1 // pred_fallthru
      _
    // Predicated region
    $region30: #{tpu_custom_call.1} parent=1 // pred_check
      _
    $region31: #{tpu_custom_call.1} parent=1 // pred_check_branch
      %113 = sbr.rel (0) target = $region33
    $region32: #{tpu_custom_call.1} parent=1 // pred_region
      %s115 = ssub.s32 16, 16
      %116 = vsyncadd [#allocation15], %s115
      %s118 = sshll.u32 [#allocation14], 4
      %s119 = int_to_ptr.vmem [resolvable:$true] %s118
      %121 = dma.hbm_to_vmem [thread:$0]  %s7, 16, %s119, [#allocation15]
    $region33: #{tpu_custom_call.1} parent=1 // pred_fallthru
      _
    // Predicated region
    $region34: #{tpu_custom_call.1} parent=1 // pred_check
      _
    $region35: #{tpu_custom_call.1} parent=1 // pred_check_branch
      %123 = sbr.rel (0) target = $region37
    $region36: #{tpu_custom_call.1} parent=1 // pred_region
      %s125 = ssub.s32 16, 16
      %126 = vsyncadd [#allocation15], %s125
      %s128 = sshll.u32 [#allocation16], 4
      %s129 = int_to_ptr.vmem [resolvable:$true] %s128
      %131 = dma.hbm_to_vmem [thread:$0]  %s8, 16, %s129, [#allocation15]
    $region37: #{tpu_custom_call.1} parent=1 // pred_fallthru
      _
    // Predicated region
    $region38: #{tpu_custom_call.1} parent=1 // pred_check
      _
    $region39: #{tpu_custom_call.1} parent=1 // pred_check_branch
      %133 = sbr.rel (0) target = $region41
    $region40: #{tpu_custom_call.1} parent=1 // pred_region
      %s135 = ssub.s32 1024, 1024
      %136 = vsyncadd [#allocation18], %s135
      %s137 = sshll.u32 [#allocation17], 4
      %s138 = int_to_ptr.vmem [resolvable:$true] %s137
      %143 = dma.hbm_to_vmem [thread:$0]  %s9, 1024, %s138, [#allocation18], 64, 64, 4
    $region41: #{tpu_custom_call.1} parent=1 // pred_fallthru
      _
    // Predicated region
    $region42: #{tpu_custom_call.1} parent=1 // pred_check
      _
    $region43: #{tpu_custom_call.1} parent=1 // pred_check_branch
      %145 = sbr.rel (0) target = $region45
    $region44: #{tpu_custom_call.1} parent=1 // pred_region
      %s147 = ssub.s32 16, 16
      %148 = vsyncadd [#allocation18], %s147
      %s150 = sshll.u32 [#allocation19], 4
      %s151 = int_to_ptr.vmem [resolvable:$true] %s150
      %153 = dma.hbm_to_vmem [thread:$0]  %s10, 16, %s151, [#allocation18]
    $region45: #{tpu_custom_call.1} parent=1 // pred_fallthru
      _
    // Predicated region
    $region46: #{tpu_custom_call.1} parent=1 // pred_check
      _
    $region47: #{tpu_custom_call.1} parent=1 // pred_check_branch
      %155 = sbr.rel (0) target = $region49
    $region48: #{tpu_custom_call.1} parent=1 // pred_region
      %s157 = ssub.s32 16, 16
      %158 = vsyncadd [#allocation21], %s157
      %s160 = sshll.u32 [#allocation20], 4
      %s161 = int_to_ptr.vmem [resolvable:$true] %s160
      %163 = dma.hbm_to_vmem [thread:$0]  %s11, 16, %s161, [#allocation21]
    $region49: #{tpu_custom_call.1} parent=1 // pred_fallthru
      _
    // Predicated region
    $region50: #{tpu_custom_call.1} parent=1 // pred_check
      _
    $region51: #{tpu_custom_call.1} parent=1 // pred_check_branch
      %165 = sbr.rel (0) target = $region53
    $region52: #{tpu_custom_call.1} parent=1 // pred_region
      %s167 = ssub.s32 16, 16
      %168 = vsyncadd [#allocation21], %s167
      %s170 = sshll.u32 [#allocation22], 4
      %s171 = int_to_ptr.vmem [resolvable:$true] %s170
      %173 = dma.hbm_to_vmem [thread:$0]  %s12, 16, %s171, [#allocation21]
    $region53: #{tpu_custom_call.1} parent=1 // pred_fallthru
      _
    // Predicated region
    $region54: #{tpu_custom_call.1} parent=1 // pred_check
      _
    $region55: #{tpu_custom_call.1} parent=1 // pred_check_branch
      %175 = sbr.rel (0) target = $region57
    $region56: #{tpu_custom_call.1} parent=1 // pred_region
      %s177 = ssub.s32 1024, 1024
      %178 = vsyncadd [#allocation24], %s177
      %s179 = sshll.u32 [#allocation23], 4
      %s180 = int_to_ptr.vmem [resolvable:$true] %s179
      %185 = dma.hbm_to_vmem [thread:$0]  %s13, 1024, %s180, [#allocation24], 64, 64, 4
    $region57: #{tpu_custom_call.1} parent=1 // pred_fallthru
      _
    // Predicated region
    $region58: #{tpu_custom_call.1} parent=1 // pred_check
      _
    $region59: #{tpu_custom_call.1} parent=1 // pred_check_branch
      %187 = sbr.rel (0) target = $region61
    $region60: #{tpu_custom_call.1} parent=1 // pred_region
      %s189 = ssub.s32 16, 16
      %190 = vsyncadd [#allocation24], %s189
      %s192 = sshll.u32 [#allocation25], 4
      %s193 = int_to_ptr.vmem [resolvable:$true] %s192
      %195 = dma.hbm_to_vmem [thread:$0]  %s14, 16, %s193, [#allocation24]
    $region61: #{tpu_custom_call.1} parent=1 // pred_fallthru
      _
    // Predicated region
    $region62: #{tpu_custom_call.1} parent=1 // pred_check
      _
    $region63: #{tpu_custom_call.1} parent=1 // pred_check_branch
      %197 = sbr.rel (0) target = $region65
    $region64: #{tpu_custom_call.1} parent=1 // pred_region
      %s199 = ssub.s32 16, 16
      %200 = vsyncadd [#allocation27], %s199
      %s202 = sshll.u32 [#allocation26], 4
      %s203 = int_to_ptr.vmem [resolvable:$true] %s202
      %205 = dma.hbm_to_vmem [thread:$0]  %s15, 16, %s203, [#allocation27]
    $region65: #{tpu_custom_call.1} parent=1 // pred_fallthru
      _
    // Predicated region
    $region66: #{tpu_custom_call.1} parent=1 // pred_check
      _
    $region67: #{tpu_custom_call.1} parent=1 // pred_check_branch
      %207 = sbr.rel (0) target = $region69
    $region68: #{tpu_custom_call.1} parent=1 // pred_region
      %s209 = ssub.s32 16, 16
      %210 = vsyncadd [#allocation27], %s209
      %s212 = sshll.u32 [#allocation28], 4
      %s213 = int_to_ptr.vmem [resolvable:$true] %s212
      %215 = dma.hbm_to_vmem [thread:$0]  %s16, 16, %s213, [#allocation27]
    $region69: #{tpu_custom_call.1} parent=1 // pred_fallthru
      _
    // Predicated region
    $region70: #{tpu_custom_call.1} parent=1 // pred_check
      _
    $region71: #{tpu_custom_call.1} parent=1 // pred_check_branch
      %217 = sbr.rel (0) target = $region73
    $region72: #{tpu_custom_call.1} parent=1 // pred_region
      _
    $region73: #{tpu_custom_call.1} parent=1 // pred_fallthru
      _
    // Predicated region
    $region74: #{tpu_custom_call.1} parent=1 // pred_check
      _
    $region75: #{tpu_custom_call.1} parent=1 // pred_check_branch
      %219 = sbr.rel (0) target = $region77
    $region76: #{tpu_custom_call.1} parent=1 // pred_region
      _
    $region77: #{tpu_custom_call.1} parent=1 // pred_fallthru
      _
    // Predicated region
    $region78: #{tpu_custom_call.1} parent=1 // pred_check
      _
    $region79: #{tpu_custom_call.1} parent=1 // pred_check_branch
      %221 = sbr.rel (0) target = $region81
    $region80: #{tpu_custom_call.1} parent=1 // pred_region
      %222 = dma.done [#allocation3], 128
    $region81: #{tpu_custom_call.1} parent=1 // pred_fallthru
      _
    // Predicated region
    $region82: #{tpu_custom_call.1} parent=1 // pred_check
      _
    $region83: #{tpu_custom_call.1} parent=1 // pred_check_branch
      %224 = sbr.rel (0) target = $region85
    $region84: #{tpu_custom_call.1} parent=1 // pred_region
      %225 = dma.done [#allocation6], 512
    $region85: #{tpu_custom_call.1} parent=1 // pred_fallthru
      _
    // Predicated region
    $region86: #{tpu_custom_call.1} parent=1 // pred_check
      _
    $region87: #{tpu_custom_call.1} parent=1 // pred_check_branch
      %227 = sbr.rel (0) target = $region89
    $region88: #{tpu_custom_call.1} parent=1 // pred_region
      %228 = dma.done [#allocation6], 2048
    $region89: #{tpu_custom_call.1} parent=1 // pred_fallthru
      _
    // Predicated region
    $region90: #{tpu_custom_call.1} parent=1 // pred_check
      _
    $region91: #{tpu_custom_call.1} parent=1 // pred_check_branch
      %230 = sbr.rel (0) target = $region93
    $region92: #{tpu_custom_call.1} parent=1 // pred_region
      %231 = dma.done [#allocation9], 16
    $region93: #{tpu_custom_call.1} parent=1 // pred_fallthru
      _
    // Predicated region
    $region94: #{tpu_custom_call.1} parent=1 // pred_check
      _
    $region95: #{tpu_custom_call.1} parent=1 // pred_check_branch
      %233 = sbr.rel (0) target = $region97
    $region96: #{tpu_custom_call.1} parent=1 // pred_region
      %234 = dma.done [#allocation9], 16
    $region97: #{tpu_custom_call.1} parent=1 // pred_fallthru
      _
    // Predicated region
    $region98: #{tpu_custom_call.1} parent=1 // pred_check
      _
    $region99: #{tpu_custom_call.1} parent=1 // pred_check_branch
      %236 = sbr.rel (0) target = $region101
    $region100: #{tpu_custom_call.1} parent=1 // pred_region
      %237 = dma.done [#allocation12], 1024
    $region101: #{tpu_custom_call.1} parent=1 // pred_fallthru
      _
    // Predicated region
    $region102: #{tpu_custom_call.1} parent=1 // pred_check
      _
    $region103: #{tpu_custom_call.1} parent=1 // pred_check_branch
      %239 = sbr.rel (0) target = $region105
    $region104: #{tpu_custom_call.1} parent=1 // pred_region
      %240 = dma.done [#allocation12], 16
    $region105: #{tpu_custom_call.1} parent=1 // pred_fallthru
      _
    // Predicated region
    $region106: #{tpu_custom_call.1} parent=1 // pred_check
      _
    $region107: #{tpu_custom_call.1} parent=1 // pred_check_branch
      %242 = sbr.rel (0) target = $region109
    $region108: #{tpu_custom_call.1} parent=1 // pred_region
      %243 = dma.done [#allocation15], 16
    $region109: #{tpu_custom_call.1} parent=1 // pred_fallthru
      _
    // Predicated region
    $region110: #{tpu_custom_call.1} parent=1 // pred_check
      _
    $region111: #{tpu_custom_call.1} parent=1 // pred_check_branch
      %245 = sbr.rel (0) target = $region113
    $region112: #{tpu_custom_call.1} parent=1 // pred_region
      %246 = dma.done [#allocation15], 16
    $region113: #{tpu_custom_call.1} parent=1 // pred_fallthru
      _
    // Predicated region
    $region114: #{tpu_custom_call.1} parent=1 // pred_check
      _
    $region115: #{tpu_custom_call.1} parent=1 // pred_check_branch
      %248 = sbr.rel (0) target = $region117
    $region116: #{tpu_custom_call.1} parent=1 // pred_region
      %249 = dma.done [#allocation18], 1024
    $region117: #{tpu_custom_call.1} parent=1 // pred_fallthru
      _
    // Predicated region
    $region118: #{tpu_custom_call.1} parent=1 // pred_check
      _
    $region119: #{tpu_custom_call.1} parent=1 // pred_check_branch
      %251 = sbr.rel (0) target = $region121
    $region120: #{tpu_custom_call.1} parent=1 // pred_region
      %252 = dma.done [#allocation18], 16
    $region121: #{tpu_custom_call.1} parent=1 // pred_fallthru
      _
    // Predicated region
    $region122: #{tpu_custom_call.1} parent=1 // pred_check
      _
    $region123: #{tpu_custom_call.1} parent=1 // pred_check_branch
      %254 = sbr.rel (0) target = $region125
    $region124: #{tpu_custom_call.1} parent=1 // pred_region
      %255 = dma.done [#allocation21], 16
    $region125: #{tpu_custom_call.1} parent=1 // pred_fallthru
      _
    // Predicated region
    $region126: #{tpu_custom_call.1} parent=1 // pred_check
      _
    $region127: #{tpu_custom_call.1} parent=1 // pred_check_branch
      %257 = sbr.rel (0) target = $region129
    $region128: #{tpu_custom_call.1} parent=1 // pred_region
      %258 = dma.done [#allocation21], 16
    $region129: #{tpu_custom_call.1} parent=1 // pred_fallthru
      _
    // Predicated region
    $region130: #{tpu_custom_call.1} parent=1 // pred_check
      _
    $region131: #{tpu_custom_call.1} parent=1 // pred_check_branch
      %260 = sbr.rel (0) target = $region133
    $region132: #{tpu_custom_call.1} parent=1 // pred_region
      %261 = dma.done [#allocation24], 1024
    $region133: #{tpu_custom_call.1} parent=1 // pred_fallthru
      _
    // Predicated region
    $region134: #{tpu_custom_call.1} parent=1 // pred_check
      _
    $region135: #{tpu_custom_call.1} parent=1 // pred_check_branch
      %263 = sbr.rel (0) target = $region137
    $region136: #{tpu_custom_call.1} parent=1 // pred_region
      %264 = dma.done [#allocation24], 16
    $region137: #{tpu_custom_call.1} parent=1 // pred_fallthru
      _
    // Predicated region
    $region138: #{tpu_custom_call.1} parent=1 // pred_check
      _
    $region139: #{tpu_custom_call.1} parent=1 // pred_check_branch
      %266 = sbr.rel (0) target = $region141
    $region140: #{tpu_custom_call.1} parent=1 // pred_region
      %267 = dma.done [#allocation27], 16
    $region141: #{tpu_custom_call.1} parent=1 // pred_fallthru
      _
    // Predicated region
    $region142: #{tpu_custom_call.1} parent=1 // pred_check
      _
    $region143: #{tpu_custom_call.1} parent=1 // pred_check_branch
      %269 = sbr.rel (0) target = $region145
    $region144: #{tpu_custom_call.1} parent=1 // pred_region
      %270 = dma.done [#allocation27], 16
    $region145: #{tpu_custom_call.1} parent=1 // pred_fallthru
      _
    %v272 = vld [vmem:[#allocation2] sm:$0xf]
    %v273 = vld [vmem:[#allocation2 + $0x4] sm:$0xf]
    %v274 = vld [vmem:[#allocation5] sm:$0xff]
    %v275 = vld [vmem:[#allocation5 + $0x8] sm:$0xff]
    %v276 = vld [vmem:[#allocation5 + $0x10] sm:$0xff]
    %v277 = vld [vmem:[#allocation5 + $0x18] sm:$0xff]
    %v278 = vld [vmem:[#allocation7] sm:$0xff]
    %v279 = vld [vmem:[#allocation7 + $0x8] sm:$0xff]
    %v280 = vld [vmem:[#allocation7 + $0x10] sm:$0xff]
    %v281 = vld [vmem:[#allocation7 + $0x18] sm:$0xff]
    %v282 = vld [vmem:[#allocation7 + $0x20] sm:$0xff]
    %v283 = vld [vmem:[#allocation7 + $0x28] sm:$0xff]
    %v284 = vld [vmem:[#allocation7 + $0x30] sm:$0xff]
    %v285 = vld [vmem:[#allocation7 + $0x38] sm:$0xff]
    %v286 = vld [vmem:[#allocation7 + $0x40] sm:$0xff]
    %v287 = vld [vmem:[#allocation7 + $0x48] sm:$0xff]
    %v288 = vld [vmem:[#allocation7 + $0x50] sm:$0xff]
    %v289 = vld [vmem:[#allocation7 + $0x58] sm:$0xff]
    %v290 = vld [vmem:[#allocation7 + $0x60] sm:$0xff]
    %v291 = vld [vmem:[#allocation7 + $0x68] sm:$0xff]
    %v292 = vld [vmem:[#allocation7 + $0x70] sm:$0xff]
    %v293 = vld [vmem:[#allocation7 + $0x78] sm:$0xff]
    %v296 = vunpack.c.l.b16 %v272
    %v297 = vunpack.c.l.b16 %v273
    %v298 = vpack.c.b16 %v297, %v296
    %v316 = vunpack.c.l.b16 %v278
    %v317 = vunpack.c.h.b16 %v278
    %v318 = vunpack.c.l.b16 %v279
    %v319 = vunpack.c.h.b16 %v279
    %v320 = vunpack.c.l.b16 %v280
    %v321 = vunpack.c.h.b16 %v280
    %v322 = vunpack.c.l.b16 %v281
    %v323 = vunpack.c.h.b16 %v281
    %v324 = vunpack.c.l.b16 %v282
    %v325 = vunpack.c.h.b16 %v282
    %v326 = vunpack.c.l.b16 %v283
    %v327 = vunpack.c.h.b16 %v283
    %v328 = vunpack.c.l.b16 %v284
    %v329 = vunpack.c.h.b16 %v284
    %v330 = vunpack.c.l.b16 %v285
    %v331 = vunpack.c.h.b16 %v285
    %v332 = vunpack.c.l.b16 %v286
    %v333 = vunpack.c.h.b16 %v286
    %v334 = vunpack.c.l.b16 %v287
    %v335 = vunpack.c.h.b16 %v287
    %v336 = vunpack.c.l.b16 %v288
    %v337 = vunpack.c.h.b16 %v288
    %v338 = vunpack.c.l.b16 %v289
    %v339 = vunpack.c.h.b16 %v289
    %v340 = vunpack.c.l.b16 %v290
    %v341 = vunpack.c.h.b16 %v290
    %v342 = vunpack.c.l.b16 %v291
    %v343 = vunpack.c.h.b16 %v291
    %v344 = vunpack.c.l.b16 %v292
    %v345 = vunpack.c.h.b16 %v292
    %v346 = vunpack.c.l.b16 %v293
    %v347 = vunpack.c.h.b16 %v293
    %v348 = vpack.c.b16 %v318, %v316
    %v349 = vpack.c.b16 %v319, %v317
    %v350 = vpack.c.b16 %v322, %v320
    %v351 = vpack.c.b16 %v323, %v321
    %v352 = vpack.c.b16 %v326, %v324
    %v353 = vpack.c.b16 %v327, %v325
    %v354 = vpack.c.b16 %v330, %v328
    %v355 = vpack.c.b16 %v331, %v329
    %v356 = vpack.c.b16 %v334, %v332
    %v357 = vpack.c.b16 %v335, %v333
    %v358 = vpack.c.b16 %v338, %v336
    %v359 = vpack.c.b16 %v339, %v337
    %v360 = vpack.c.b16 %v342, %v340
    %v361 = vpack.c.b16 %v343, %v341
    %v362 = vpack.c.b16 %v346, %v344
    %v363 = vpack.c.b16 %v347, %v345
    %380 = vmatprep.subr.bf16.mxu0 %v349
    %381 = vmatpush1.bf16.msra.mxu0 %v348
    %382 = vmatprep.subr.bf16.mxu0 %v351
    %383 = vmatpush1.bf16.msra.mxu0 %v350
    %384 = vmatprep.subr.bf16.mxu0 %v353
    %385 = vmatpush1.bf16.msra.mxu0 %v352
    %386 = vmatprep.subr.bf16.mxu0 %v355
    %387 = vmatpush1.bf16.msra.mxu0 %v354
    %388 = vmatprep.subr.bf16.mxu0 %v357
    %389 = vmatpush1.bf16.msra.mxu0 %v356
    %390 = vmatprep.subr.bf16.mxu0 %v359
    %391 = vmatpush1.bf16.msra.mxu0 %v358
    %392 = vmatprep.subr.bf16.mxu0 %v361
    %393 = vmatpush1.bf16.msra.mxu0 %v360
    %394 = vmatprep.subr.bf16.mxu0 %v363
    %395 = vmatpush1.bf16.msra.mxu0 %v362
    %396 = vmatprep.subr.bf16.mxu0 0
    %397 = vmatpush1.bf16.msra.mxu0 0
    %398 = vmatprep.subr.bf16.mxu0 0
    %399 = vmatpush1.bf16.msra.mxu0 0
    %400 = vmatprep.subr.bf16.mxu0 0
    %401 = vmatpush1.bf16.msra.mxu0 0
    %402 = vmatprep.subr.bf16.mxu0 0
    %403 = vmatpush1.bf16.msra.mxu0 0
    %404 = vmatprep.subr.bf16.mxu0 0
    %405 = vmatpush1.bf16.msra.mxu0 0
    %406 = vmatprep.subr.bf16.mxu0 0
    %407 = vmatpush1.bf16.msra.mxu0 0
    %408 = vmatprep.subr.bf16.mxu0 0
    %409 = vmatpush1.bf16.msra.mxu0 0
    %410 = vmatprep.subr.bf16.mxu0 0
    %411 = vmatpush1.bf16.msra.mxu0 0
    %412 = vmatprep.mubr.bf16.mxu0 0
    %413 = vmatmul.mubr.bf16.gmra.mrb[0].mxu0 %v298
    %v414 = vpop.f32.mrb[0].mxu0
    %v415 = vadd.f32 %v274, %v414
    %v416 = vpop.f32.mrb[0].mxu0
    %v417 = vadd.f32 %v275, %v416
    %v418 = vpop.f32.mrb[0].mxu0
    %v419 = vadd.f32 %v276, %v418
    %v420 = vpop.f32.mrb[0].mxu0
    %v421 = vadd.f32 %v277, %v420
    %422 = vdwg.mxu0
    %v423 = vld [vmem:[#allocation8] sm:$0x1]
    %v424 = vld [vmem:[#allocation10] sm:$0x1]
    %425 = vadd.xlane.f32.xlu0 %v415
    %v426 = vpop.xlane.xlu0 %425
    %427 = vadd.xlane.f32.xlu0 %v419
    %v428 = vpop.xlane.xlu0 %427
    %v429 = vmul.f32 %v426, 0.015625
    %v430 = vmul.f32 %v428, 0.015625
    %v431 = vmul.f32 %v415, %v415
    %v432 = vmul.f32 %v419, %v419
    %433 = vadd.xlane.f32.xlu0 %v431
    %v434 = vpop.xlane.xlu0 %433
    %435 = vadd.xlane.f32.xlu0 %v432
    %v436 = vpop.xlane.xlu0 %435
    %v437 = vmul.f32 %v434, 0.015625
    %v438 = vmul.f32 %v436, 0.015625
    %v439 = vmul.f32 %v429, %v429
    %v440 = vmul.f32 %v430, %v430
    %v441 = vsub.f32 %v437, %v439
    %v442 = vsub.f32 %v438, %v440
    %v443 = vmax.f32 %v441, 0.0
    %v444 = vmax.f32 %v442, 0.0
    %v445 = vsub.f32 %v415, %v429
    %v446 = vsub.f32 %v419, %v430
    %v447 = vadd.f32 %v443, 1e-05
    %v448 = vadd.f32 %v444, 1e-05
    %v449 = vrsqrt.pop %v447
    %v450 = vrsqrt.pop %v448
    %v451 = vmul.f32 %v445, %v449
    %v452 = vmul.f32 %v446, %v450
    %v454 = vlaneseq
    %v455 = vshrl.u32 %v454, 7
    %v456 = vsub.s32 0, %v455
    %v457 = vrot.slane %v423, %v456
    %v459 = vmul.f32 %v451, %v457
    %v460 = vmul.f32 %v452, %v457
    %v462 = vlaneseq
    %v463 = vshrl.u32 %v462, 7
    %v464 = vsub.s32 0, %v463
    %v465 = vrot.slane %v424, %v464
    %v467 = vadd.f32 %v459, %v465
    %v468 = vadd.f32 %v460, %v465
    %v469 = vxor.u32 %v467, 2147483648
    %v470 = vxor.u32 %v468, 2147483648
    %v471 = vmul.f32 %v469, 1.442695
    %v472 = vpow.pop %v471
    %v473 = vmul.f32 %v470, 1.442695
    %v474 = vpow.pop %v473
    %v475 = vadd.f32 %v472, 1.0
    %v476 = vadd.f32 %v474, 1.0
    %v477 = vrcp.pop %v475
    %v478 = vmul.f32 1.0, %v477
    %v479 = vrcp.pop %v476
    %v480 = vmul.f32 1.0, %v479
    %v481 = vmul.f32 %v467, %v478
    %v482 = vmul.f32 %v468, %v480
    %v483 = vpack.c.bf16 %v482, %v481
    %v484 = vld [vmem:[#allocation11] sm:$0xf]
    %v485 = vld [vmem:[#allocation11 + $0x4] sm:$0xf]
    %v486 = vld [vmem:[#allocation11 + $0x8] sm:$0xf]
    %v487 = vld [vmem:[#allocation11 + $0xc] sm:$0xf]
    %v488 = vld [vmem:[#allocation11 + $0x10] sm:$0xf]
    %v489 = vld [vmem:[#allocation11 + $0x14] sm:$0xf]
    %v490 = vld [vmem:[#allocation11 + $0x18] sm:$0xf]
    %v491 = vld [vmem:[#allocation11 + $0x1c] sm:$0xf]
    %v492 = vld [vmem:[#allocation11 + $0x20] sm:$0xf]
    %v493 = vld [vmem:[#allocation11 + $0x24] sm:$0xf]
    %v494 = vld [vmem:[#allocation11 + $0x28] sm:$0xf]
    %v495 = vld [vmem:[#allocation11 + $0x2c] sm:$0xf]
    %v496 = vld [vmem:[#allocation11 + $0x30] sm:$0xf]
    %v497 = vld [vmem:[#allocation11 + $0x34] sm:$0xf]
    %v498 = vld [vmem:[#allocation11 + $0x38] sm:$0xf]
    %v499 = vld [vmem:[#allocation11 + $0x3c] sm:$0xf]
    %v500 = vld [vmem:[#allocation13] sm:$0x1]
    %v502 = vlaneseq
    %v503 = vshrl.u32 %v502, 7
    %v504 = vsub.s32 0, %v503
    %v505 = vrot.slane %v500, %v504
    %v523 = vunpack.c.l.b16 %v484
    %v524 = vunpack.c.l.b16 %v485
    %v525 = vunpack.c.l.b16 %v486
    %v526 = vunpack.c.l.b16 %v487
    %v527 = vunpack.c.l.b16 %v488
    %v528 = vunpack.c.l.b16 %v489
    %v529 = vunpack.c.l.b16 %v490
    %v530 = vunpack.c.l.b16 %v491
    %v531 = vunpack.c.l.b16 %v492
    %v532 = vunpack.c.l.b16 %v493
    %v533 = vunpack.c.l.b16 %v494
    %v534 = vunpack.c.l.b16 %v495
    %v535 = vunpack.c.l.b16 %v496
    %v536 = vunpack.c.l.b16 %v497
    %v537 = vunpack.c.l.b16 %v498
    %v538 = vunpack.c.l.b16 %v499
    %v539 = vpack.c.b16 %v524, %v523
    %v540 = vpack.c.b16 %v526, %v525
    %v541 = vpack.c.b16 %v528, %v527
    %v542 = vpack.c.b16 %v530, %v529
    %v543 = vpack.c.b16 %v532, %v531
    %v544 = vpack.c.b16 %v534, %v533
    %v545 = vpack.c.b16 %v536, %v535
    %v546 = vpack.c.b16 %v538, %v537
    %555 = vmatprep.subr.bf16.mxu0 0
    %556 = vmatpush1.bf16.msra.mxu0 %v539
    %557 = vmatprep.subr.bf16.mxu0 0
    %558 = vmatpush1.bf16.msra.mxu0 %v540
    %559 = vmatprep.subr.bf16.mxu0 0
    %560 = vmatpush1.bf16.msra.mxu0 %v541
    %561 = vmatprep.subr.bf16.mxu0 0
    %562 = vmatpush1.bf16.msra.mxu0 %v542
    %563 = vmatprep.subr.bf16.mxu0 0
    %564 = vmatpush1.bf16.msra.mxu0 %v543
    %565 = vmatprep.subr.bf16.mxu0 0
    %566 = vmatpush1.bf16.msra.mxu0 %v544
    %567 = vmatprep.subr.bf16.mxu0 0
    %568 = vmatpush1.bf16.msra.mxu0 %v545
    %569 = vmatprep.subr.bf16.mxu0 0
    %570 = vmatpush1.bf16.msra.mxu0 %v546
    %571 = vmatprep.subr.bf16.mxu0 0
    %572 = vmatpush1.bf16.msra.mxu0 0
    %573 = vmatprep.subr.bf16.mxu0 0
    %574 = vmatpush1.bf16.msra.mxu0 0
    %575 = vmatprep.subr.bf16.mxu0 0
    %576 = vmatpush1.bf16.msra.mxu0 0
    %577 = vmatprep.subr.bf16.mxu0 0
    %578 = vmatpush1.bf16.msra.mxu0 0
    %579 = vmatprep.subr.bf16.mxu0 0
    %580 = vmatpush1.bf16.msra.mxu0 0
    %581 = vmatprep.subr.bf16.mxu0 0
    %582 = vmatpush1.bf16.msra.mxu0 0
    %583 = vmatprep.subr.bf16.mxu0 0
    %584 = vmatpush1.bf16.msra.mxu0 0
    %585 = vmatprep.subr.bf16.mxu0 0
    %586 = vmatpush1.bf16.msra.mxu0 0
    %587 = vmatprep.mubr.bf16.mxu0 0
    %588 = vmatmul.mubr.bf16.gmra.mrb[0].mxu0 %v483
    %v589 = vpop.f32.mrb[0].mxu0
    %v590 = vadd.f32 %v505, %v589
    %v591 = vpop.f32.mrb[0].mxu0
    %v592 = vpop.f32.mrb[0].mxu0
    %v593 = vadd.f32 %v505, %v592
    %v594 = vpop.f32.mrb[0].mxu0
    %595 = vdwg.mxu0
    %v596 = vld [vmem:[#allocation14] sm:$0x1]
    %v597 = vld [vmem:[#allocation16] sm:$0x1]
    %598 = vadd.xlane.f32.xlu0 %v590
    %v599 = vpop.xlane.xlu0 %598
    %600 = vadd.xlane.f32.xlu0 %v593
    %v601 = vpop.xlane.xlu0 %600
    %v602 = vmul.f32 %v599, 0.015625
    %v603 = vmul.f32 %v601, 0.015625
    %v604 = vmul.f32 %v590, %v590
    %v605 = vmul.f32 %v593, %v593
    %606 = vadd.xlane.f32.xlu0 %v604
    %v607 = vpop.xlane.xlu0 %606
    %608 = vadd.xlane.f32.xlu0 %v605
    %v609 = vpop.xlane.xlu0 %608
    %v610 = vmul.f32 %v607, 0.015625
    %v611 = vmul.f32 %v609, 0.015625
    %v612 = vmul.f32 %v602, %v602
    %v613 = vmul.f32 %v603, %v603
    %v614 = vsub.f32 %v610, %v612
    %v615 = vsub.f32 %v611, %v613
    %v616 = vmax.f32 %v614, 0.0
    %v617 = vmax.f32 %v615, 0.0
    %v618 = vsub.f32 %v590, %v602
    %v619 = vsub.f32 %v593, %v603
    %v620 = vadd.f32 %v616, 1e-05
    %v621 = vadd.f32 %v617, 1e-05
    %v622 = vrsqrt.pop %v620
    %v623 = vrsqrt.pop %v621
    %v624 = vmul.f32 %v618, %v622
    %v625 = vmul.f32 %v619, %v623
    %v627 = vlaneseq
    %v628 = vshrl.u32 %v627, 7
    %v629 = vsub.s32 0, %v628
    %v630 = vrot.slane %v596, %v629
    %v632 = vmul.f32 %v624, %v630
    %v633 = vmul.f32 %v625, %v630
    %v635 = vlaneseq
    %v636 = vshrl.u32 %v635, 7
    %v637 = vsub.s32 0, %v636
    %v638 = vrot.slane %v597, %v637
    %v640 = vadd.f32 %v632, %v638
    %v641 = vadd.f32 %v633, %v638
    %v642 = vadd.f32 %v640, %v417
    %v643 = vadd.f32 %v641, %v421
    %v644 = vxor.u32 %v642, 2147483648
    %v645 = vxor.u32 %v643, 2147483648
    %v646 = vmul.f32 %v644, 1.442695
    %v647 = vpow.pop %v646
    %v648 = vmul.f32 %v645, 1.442695
    %v649 = vpow.pop %v648
    %v650 = vadd.f32 %v647, 1.0
    %v651 = vadd.f32 %v649, 1.0
    %v652 = vrcp.pop %v650
    %v653 = vmul.f32 1.0, %v652
    %v654 = vrcp.pop %v651
    %v655 = vmul.f32 1.0, %v654
    %v656 = vmul.f32 %v642, %v653
    %v657 = vmul.f32 %v643, %v655
    %v658 = vpack.c.bf16 %v657, %v656
    %v659 = vld [vmem:[#allocation17] sm:$0xf]
    %v660 = vld [vmem:[#allocation17 + $0x4] sm:$0xf]
    %v661 = vld [vmem:[#allocation17 + $0x8] sm:$0xf]
    %v662 = vld [vmem:[#allocation17 + $0xc] sm:$0xf]
    %v663 = vld [vmem:[#allocation17 + $0x10] sm:$0xf]
    %v664 = vld [vmem:[#allocation17 + $0x14] sm:$0xf]
    %v665 = vld [vmem:[#allocation17 + $0x18] sm:$0xf]
    %v666 = vld [vmem:[#allocation17 + $0x1c] sm:$0xf]
    %v667 = vld [vmem:[#allocation17 + $0x20] sm:$0xf]
    %v668 = vld [vmem:[#allocation17 + $0x24] sm:$0xf]
    %v669 = vld [vmem:[#allocation17 + $0x28] sm:$0xf]
    %v670 = vld [vmem:[#allocation17 + $0x2c] sm:$0xf]
    %v671 = vld [vmem:[#allocation17 + $0x30] sm:$0xf]
    %v672 = vld [vmem:[#allocation17 + $0x34] sm:$0xf]
    %v673 = vld [vmem:[#allocation17 + $0x38] sm:$0xf]
    %v674 = vld [vmem:[#allocation17 + $0x3c] sm:$0xf]
    %v675 = vld [vmem:[#allocation19] sm:$0x1]
    %v677 = vlaneseq
    %v678 = vshrl.u32 %v677, 7
    %v679 = vsub.s32 0, %v678
    %v680 = vrot.slane %v675, %v679
    %v698 = vunpack.c.l.b16 %v659
    %v699 = vunpack.c.l.b16 %v660
    %v700 = vunpack.c.l.b16 %v661
    %v701 = vunpack.c.l.b16 %v662
    %v702 = vunpack.c.l.b16 %v663
    %v703 = vunpack.c.l.b16 %v664
    %v704 = vunpack.c.l.b16 %v665
    %v705 = vunpack.c.l.b16 %v666
    %v706 = vunpack.c.l.b16 %v667
    %v707 = vunpack.c.l.b16 %v668
    %v708 = vunpack.c.l.b16 %v669
    %v709 = vunpack.c.l.b16 %v670
    %v710 = vunpack.c.l.b16 %v671
    %v711 = vunpack.c.l.b16 %v672
    %v712 = vunpack.c.l.b16 %v673
    %v713 = vunpack.c.l.b16 %v674
    %v714 = vpack.c.b16 %v699, %v698
    %v715 = vpack.c.b16 %v701, %v700
    %v716 = vpack.c.b16 %v703, %v702
    %v717 = vpack.c.b16 %v705, %v704
    %v718 = vpack.c.b16 %v707, %v706
    %v719 = vpack.c.b16 %v709, %v708
    %v720 = vpack.c.b16 %v711, %v710
    %v721 = vpack.c.b16 %v713, %v712
    %730 = vmatprep.subr.bf16.mxu0 0
    %731 = vmatpush1.bf16.msra.mxu0 %v714
    %732 = vmatprep.subr.bf16.mxu0 0
    %733 = vmatpush1.bf16.msra.mxu0 %v715
    %734 = vmatprep.subr.bf16.mxu0 0
    %735 = vmatpush1.bf16.msra.mxu0 %v716
    %736 = vmatprep.subr.bf16.mxu0 0
    %737 = vmatpush1.bf16.msra.mxu0 %v717
    %738 = vmatprep.subr.bf16.mxu0 0
    %739 = vmatpush1.bf16.msra.mxu0 %v718
    %740 = vmatprep.subr.bf16.mxu0 0
    %741 = vmatpush1.bf16.msra.mxu0 %v719
    %742 = vmatprep.subr.bf16.mxu0 0
    %743 = vmatpush1.bf16.msra.mxu0 %v720
    %744 = vmatprep.subr.bf16.mxu0 0
    %745 = vmatpush1.bf16.msra.mxu0 %v721
    %746 = vmatprep.subr.bf16.mxu0 0
    %747 = vmatpush1.bf16.msra.mxu0 0
    %748 = vmatprep.subr.bf16.mxu0 0
    %749 = vmatpush1.bf16.msra.mxu0 0
    %750 = vmatprep.subr.bf16.mxu0 0
    %751 = vmatpush1.bf16.msra.mxu0 0
    %752 = vmatprep.subr.bf16.mxu0 0
    %753 = vmatpush1.bf16.msra.mxu0 0
    %754 = vmatprep.subr.bf16.mxu0 0
    %755 = vmatpush1.bf16.msra.mxu0 0
    %756 = vmatprep.subr.bf16.mxu0 0
    %757 = vmatpush1.bf16.msra.mxu0 0
    %758 = vmatprep.subr.bf16.mxu0 0
    %759 = vmatpush1.bf16.msra.mxu0 0
    %760 = vmatprep.subr.bf16.mxu0 0
    %761 = vmatpush1.bf16.msra.mxu0 0
    %762 = vmatprep.mubr.bf16.mxu0 0
    %763 = vmatmul.mubr.bf16.gmra.mrb[0].mxu0 %v658
    %v764 = vpop.f32.mrb[0].mxu0
    %v765 = vadd.f32 %v680, %v764
    %v766 = vpop.f32.mrb[0].mxu0
    %v767 = vpop.f32.mrb[0].mxu0
    %v768 = vadd.f32 %v680, %v767
    %v769 = vpop.f32.mrb[0].mxu0
    %770 = vdwg.mxu0
    %v771 = vld [vmem:[#allocation20] sm:$0x1]
    %v772 = vld [vmem:[#allocation22] sm:$0x1]
    %773 = vadd.xlane.f32.xlu0 %v765
    %v774 = vpop.xlane.xlu0 %773
    %775 = vadd.xlane.f32.xlu0 %v768
    %v776 = vpop.xlane.xlu0 %775
    %v777 = vmul.f32 %v774, 0.015625
    %v778 = vmul.f32 %v776, 0.015625
    %v779 = vmul.f32 %v765, %v765
    %v780 = vmul.f32 %v768, %v768
    %781 = vadd.xlane.f32.xlu0 %v779
    %v782 = vpop.xlane.xlu0 %781
    %783 = vadd.xlane.f32.xlu0 %v780
    %v784 = vpop.xlane.xlu0 %783
    %v785 = vmul.f32 %v782, 0.015625
    %v786 = vmul.f32 %v784, 0.015625
    %v787 = vmul.f32 %v777, %v777
    %v788 = vmul.f32 %v778, %v778
    %v789 = vsub.f32 %v785, %v787
    %v790 = vsub.f32 %v786, %v788
    %v791 = vmax.f32 %v789, 0.0
    %v792 = vmax.f32 %v790, 0.0
    %v793 = vsub.f32 %v765, %v777
    %v794 = vsub.f32 %v768, %v778
    %v795 = vadd.f32 %v791, 1e-05
    %v796 = vadd.f32 %v792, 1e-05
    %v797 = vrsqrt.pop %v795
    %v798 = vrsqrt.pop %v796
    %v799 = vmul.f32 %v793, %v797
    %v800 = vmul.f32 %v794, %v798
    %v802 = vlaneseq
    %v803 = vshrl.u32 %v802, 7
    %v804 = vsub.s32 0, %v803
    %v805 = vrot.slane %v771, %v804
    %v807 = vmul.f32 %v799, %v805
    %v808 = vmul.f32 %v800, %v805
    %v810 = vlaneseq
    %v811 = vshrl.u32 %v810, 7
    %v812 = vsub.s32 0, %v811
    %v813 = vrot.slane %v772, %v812
    %v815 = vadd.f32 %v807, %v813
    %v816 = vadd.f32 %v808, %v813
    %v817 = vxor.u32 %v815, 2147483648
    %v818 = vxor.u32 %v816, 2147483648
    %v819 = vmul.f32 %v817, 1.442695
    %v820 = vpow.pop %v819
    %v821 = vmul.f32 %v818, 1.442695
    %v822 = vpow.pop %v821
    %v823 = vadd.f32 %v820, 1.0
    %v824 = vadd.f32 %v822, 1.0
    %v825 = vrcp.pop %v823
    %v826 = vmul.f32 1.0, %v825
    %v827 = vrcp.pop %v824
    %v828 = vmul.f32 1.0, %v827
    %v829 = vmul.f32 %v815, %v826
    %v830 = vmul.f32 %v816, %v828
    %v831 = vpack.c.bf16 %v830, %v829
    %v832 = vld [vmem:[#allocation23] sm:$0xf]
    %v833 = vld [vmem:[#allocation23 + $0x4] sm:$0xf]
    %v834 = vld [vmem:[#allocation23 + $0x8] sm:$0xf]
    %v835 = vld [vmem:[#allocation23 + $0xc] sm:$0xf]
    %v836 = vld [vmem:[#allocation23 + $0x10] sm:$0xf]
    %v837 = vld [vmem:[#allocation23 + $0x14] sm:$0xf]
    %v838 = vld [vmem:[#allocation23 + $0x18] sm:$0xf]
    %v839 = vld [vmem:[#allocation23 + $0x1c] sm:$0xf]
    %v840 = vld [vmem:[#allocation23 + $0x20] sm:$0xf]
    %v841 = vld [vmem:[#allocation23 + $0x24] sm:$0xf]
    %v842 = vld [vmem:[#allocation23 + $0x28] sm:$0xf]
    %v843 = vld [vmem:[#allocation23 + $0x2c] sm:$0xf]
    %v844 = vld [vmem:[#allocation23 + $0x30] sm:$0xf]
    %v845 = vld [vmem:[#allocation23 + $0x34] sm:$0xf]
    %v846 = vld [vmem:[#allocation23 + $0x38] sm:$0xf]
    %v847 = vld [vmem:[#allocation23 + $0x3c] sm:$0xf]
    %v848 = vld [vmem:[#allocation25] sm:$0x1]
    %v850 = vlaneseq
    %v851 = vshrl.u32 %v850, 7
    %v852 = vsub.s32 0, %v851
    %v853 = vrot.slane %v848, %v852
    %v871 = vunpack.c.l.b16 %v832
    %v872 = vunpack.c.l.b16 %v833
    %v873 = vunpack.c.l.b16 %v834
    %v874 = vunpack.c.l.b16 %v835
    %v875 = vunpack.c.l.b16 %v836
    %v876 = vunpack.c.l.b16 %v837
    %v877 = vunpack.c.l.b16 %v838
    %v878 = vunpack.c.l.b16 %v839
    %v879 = vunpack.c.l.b16 %v840
    %v880 = vunpack.c.l.b16 %v841
    %v881 = vunpack.c.l.b16 %v842
    %v882 = vunpack.c.l.b16 %v843
    %v883 = vunpack.c.l.b16 %v844
    %v884 = vunpack.c.l.b16 %v845
    %v885 = vunpack.c.l.b16 %v846
    %v886 = vunpack.c.l.b16 %v847
    %v887 = vpack.c.b16 %v872, %v871
    %v888 = vpack.c.b16 %v874, %v873
    %v889 = vpack.c.b16 %v876, %v875
    %v890 = vpack.c.b16 %v878, %v877
    %v891 = vpack.c.b16 %v880, %v879
    %v892 = vpack.c.b16 %v882, %v881
    %v893 = vpack.c.b16 %v884, %v883
    %v894 = vpack.c.b16 %v886, %v885
    %903 = vmatprep.subr.bf16.mxu0 0
    %904 = vmatpush1.bf16.msra.mxu0 %v887
    %905 = vmatprep.subr.bf16.mxu0 0
    %906 = vmatpush1.bf16.msra.mxu0 %v888
    %907 = vmatprep.subr.bf16.mxu0 0
    %908 = vmatpush1.bf16.msra.mxu0 %v889
    %909 = vmatprep.subr.bf16.mxu0 0
    %910 = vmatpush1.bf16.msra.mxu0 %v890
    %911 = vmatprep.subr.bf16.mxu0 0
    %912 = vmatpush1.bf16.msra.mxu0 %v891
    %913 = vmatprep.subr.bf16.mxu0 0
    %914 = vmatpush1.bf16.msra.mxu0 %v892
    %915 = vmatprep.subr.bf16.mxu0 0
    %916 = vmatpush1.bf16.msra.mxu0 %v893
    %917 = vmatprep.subr.bf16.mxu0 0
    %918 = vmatpush1.bf16.msra.mxu0 %v894
    %919 = vmatprep.subr.bf16.mxu0 0
    %920 = vmatpush1.bf16.msra.mxu0 0
    %921 = vmatprep.subr.bf16.mxu0 0
    %922 = vmatpush1.bf16.msra.mxu0 0
    %923 = vmatprep.subr.bf16.mxu0 0
    %924 = vmatpush1.bf16.msra.mxu0 0
    %925 = vmatprep.subr.bf16.mxu0 0
    %926 = vmatpush1.bf16.msra.mxu0 0
    %927 = vmatprep.subr.bf16.mxu0 0
    %928 = vmatpush1.bf16.msra.mxu0 0
    %929 = vmatprep.subr.bf16.mxu0 0
    %930 = vmatpush1.bf16.msra.mxu0 0
    %931 = vmatprep.subr.bf16.mxu0 0
    %932 = vmatpush1.bf16.msra.mxu0 0
    %933 = vmatprep.subr.bf16.mxu0 0
    %934 = vmatpush1.bf16.msra.mxu0 0
    %935 = vmatprep.mubr.bf16.mxu0 0
    %936 = vmatmul.mubr.bf16.gmra.mrb[0].mxu0 %v831
    %v937 = vpop.f32.mrb[0].mxu0
    %v938 = vadd.f32 %v853, %v937
    %v939 = vpop.f32.mrb[0].mxu0
    %v940 = vpop.f32.mrb[0].mxu0
    %v941 = vadd.f32 %v853, %v940
    %v942 = vpop.f32.mrb[0].mxu0
    %943 = vdwg.mxu0
    %v944 = vld [vmem:[#allocation26] sm:$0x1]
    %v945 = vld [vmem:[#allocation28] sm:$0x1]
    %946 = vadd.xlane.f32.xlu0 %v938
    %v947 = vpop.xlane.xlu0 %946
    %948 = vadd.xlane.f32.xlu0 %v941
    %v949 = vpop.xlane.xlu0 %948
    %v950 = vmul.f32 %v947, 0.015625
    %v951 = vmul.f32 %v949, 0.015625
    %v952 = vmul.f32 %v938, %v938
    %v953 = vmul.f32 %v941, %v941
    %954 = vadd.xlane.f32.xlu0 %v952
    %v955 = vpop.xlane.xlu0 %954
    %956 = vadd.xlane.f32.xlu0 %v953
    %v957 = vpop.xlane.xlu0 %956
    %v958 = vmul.f32 %v955, 0.015625
    %v959 = vmul.f32 %v957, 0.015625
    %v960 = vmul.f32 %v950, %v950
    %v961 = vmul.f32 %v951, %v951
    %v962 = vsub.f32 %v958, %v960
    %v963 = vsub.f32 %v959, %v961
    %v964 = vmax.f32 %v962, 0.0
    %v965 = vmax.f32 %v963, 0.0
    %v966 = vsub.f32 %v938, %v950
    %v967 = vsub.f32 %v941, %v951
    %v968 = vadd.f32 %v964, 1e-05
    %v969 = vadd.f32 %v965, 1e-05
    %v970 = vrsqrt.pop %v968
    %v971 = vrsqrt.pop %v969
    %v972 = vmul.f32 %v966, %v970
    %v973 = vmul.f32 %v967, %v971
    %v975 = vlaneseq
    %v976 = vshrl.u32 %v975, 7
    %v977 = vsub.s32 0, %v976
    %v978 = vrot.slane %v944, %v977
    %v980 = vmul.f32 %v972, %v978
    %v981 = vmul.f32 %v973, %v978
    %v983 = vlaneseq
    %v984 = vshrl.u32 %v983, 7
    %v985 = vsub.s32 0, %v984
    %v986 = vrot.slane %v945, %v985
    %v988 = vadd.f32 %v980, %v986
    %v989 = vadd.f32 %v981, %v986
    %v990 = vadd.f32 %v988, %v656
    %v991 = vadd.f32 %v989, %v657
    %v992 = vxor.u32 %v990, 2147483648
    %v993 = vxor.u32 %v991, 2147483648
    %v994 = vmul.f32 %v992, 1.442695
    %v995 = vpow.pop %v994
    %v996 = vmul.f32 %v993, 1.442695
    %v997 = vpow.pop %v996
    %v998 = vadd.f32 %v995, 1.0
    %v999 = vadd.f32 %v997, 1.0
    %v1000 = vrcp.pop %v998
    %v1001 = vmul.f32 1.0, %v1000
    %v1002 = vrcp.pop %v999
    %v1003 = vmul.f32 1.0, %v1002
    %v1004 = vmul.f32 %v990, %v1001
    %v1005 = vmul.f32 %v991, %v1003
    %v1006 = vpack.c.bf16 %v1005, %v1004
    %v1007 = vld [vmem:[%s17] sm:$0xf]
    %v1008 = vld [vmem:[%s17 + $0x4] sm:$0xf]
    %v1009 = vld [vmem:[%s17 + $0x8] sm:$0xf]
    %v1010 = vld [vmem:[%s17 + $0xc] sm:$0xf]
    %v1011 = vld [vmem:[%s17 + $0x10] sm:$0xf]
    %v1012 = vld [vmem:[%s17 + $0x14] sm:$0xf]
    %v1013 = vld [vmem:[%s17 + $0x18] sm:$0xf]
    %v1014 = vld [vmem:[%s17 + $0x1c] sm:$0xf]
    %v1015 = vld [vmem:[%s17 + $0x20] sm:$0xf]
    %v1016 = vld [vmem:[%s17 + $0x24] sm:$0xf]
    %v1017 = vld [vmem:[%s17 + $0x28] sm:$0xf]
    %v1018 = vld [vmem:[%s17 + $0x2c] sm:$0xf]
    %v1019 = vld [vmem:[%s17 + $0x30] sm:$0xf]
    %v1020 = vld [vmem:[%s17 + $0x34] sm:$0xf]
    %v1021 = vld [vmem:[%s17 + $0x38] sm:$0xf]
    %v1022 = vld [vmem:[%s17 + $0x3c] sm:$0xf]
    %v1023 = vld [vmem:[%s18] sm:$0x1]
    %v1025 = vlaneseq
    %v1026 = vshrl.u32 %v1025, 7
    %v1027 = vsub.s32 0, %v1026
    %v1028 = vrot.slane %v1023, %v1027
    %v1046 = vunpack.c.l.b16 %v1007
    %v1047 = vunpack.c.l.b16 %v1008
    %v1048 = vunpack.c.l.b16 %v1009
    %v1049 = vunpack.c.l.b16 %v1010
    %v1050 = vunpack.c.l.b16 %v1011
    %v1051 = vunpack.c.l.b16 %v1012
    %v1052 = vunpack.c.l.b16 %v1013
    %v1053 = vunpack.c.l.b16 %v1014
    %v1054 = vunpack.c.l.b16 %v1015
    %v1055 = vunpack.c.l.b16 %v1016
    %v1056 = vunpack.c.l.b16 %v1017
    %v1057 = vunpack.c.l.b16 %v1018
    %v1058 = vunpack.c.l.b16 %v1019
    %v1059 = vunpack.c.l.b16 %v1020
    %v1060 = vunpack.c.l.b16 %v1021
    %v1061 = vunpack.c.l.b16 %v1022
    %v1062 = vpack.c.b16 %v1047, %v1046
    %v1063 = vpack.c.b16 %v1049, %v1048
    %v1064 = vpack.c.b16 %v1051, %v1050
    %v1065 = vpack.c.b16 %v1053, %v1052
    %v1066 = vpack.c.b16 %v1055, %v1054
    %v1067 = vpack.c.b16 %v1057, %v1056
    %v1068 = vpack.c.b16 %v1059, %v1058
    %v1069 = vpack.c.b16 %v1061, %v1060
    %1078 = vmatprep.subr.bf16.mxu0 0
    %1079 = vmatpush1.bf16.msra.mxu0 %v1062
    %1080 = vmatprep.subr.bf16.mxu0 0
    %1081 = vmatpush1.bf16.msra.mxu0 %v1063
    %1082 = vmatprep.subr.bf16.mxu0 0
    %1083 = vmatpush1.bf16.msra.mxu0 %v1064
    %1084 = vmatprep.subr.bf16.mxu0 0
    %1085 = vmatpush1.bf16.msra.mxu0 %v1065
    %1086 = vmatprep.subr.bf16.mxu0 0
    %1087 = vmatpush1.bf16.msra.mxu0 %v1066
    %1088 = vmatprep.subr.bf16.mxu0 0
    %1089 = vmatpush1.bf16.msra.mxu0 %v1067
    %1090 = vmatprep.subr.bf16.mxu0 0
    %1091 = vmatpush1.bf16.msra.mxu0 %v1068
    %1092 = vmatprep.subr.bf16.mxu0 0
    %1093 = vmatpush1.bf16.msra.mxu0 %v1069
    %1094 = vmatprep.subr.bf16.mxu0 0
    %1095 = vmatpush1.bf16.msra.mxu0 0
    %1096 = vmatprep.subr.bf16.mxu0 0
    %1097 = vmatpush1.bf16.msra.mxu0 0
    %1098 = vmatprep.subr.bf16.mxu0 0
    %1099 = vmatpush1.bf16.msra.mxu0 0
    %1100 = vmatprep.subr.bf16.mxu0 0
    %1101 = vmatpush1.bf16.msra.mxu0 0
    %1102 = vmatprep.subr.bf16.mxu0 0
    %1103 = vmatpush1.bf16.msra.mxu0 0
    %1104 = vmatprep.subr.bf16.mxu0 0
    %1105 = vmatpush1.bf16.msra.mxu0 0
    %1106 = vmatprep.subr.bf16.mxu0 0
    %1107 = vmatpush1.bf16.msra.mxu0 0
    %1108 = vmatprep.subr.bf16.mxu0 0
    %1109 = vmatpush1.bf16.msra.mxu0 0
    %1110 = vmatprep.mubr.bf16.mxu0 0
    %1111 = vmatmul.mubr.bf16.gmra.mrb[0].mxu0 %v1006
    %v1112 = vpop.f32.mrb[0].mxu0
    %v1113 = vadd.f32 %v1028, %v1112
    %v1114 = vpop.f32.mrb[0].mxu0
    %v1115 = vpop.f32.mrb[0].mxu0
    %v1116 = vadd.f32 %v1028, %v1115
    %v1117 = vpop.f32.mrb[0].mxu0
    %1118 = vdwg.mxu0
    %1119 = vst [vmem:[#allocation29] sm:$0xff] %v1113
    %1120 = vst [vmem:[#allocation29 + $0x8] sm:$0xff] %v1116
    // Predicated region
    $region146: #{tpu_custom_call.1} parent=1 // pred_check
      _
    $region147: #{tpu_custom_call.1} parent=1 // pred_check_branch
      %1122 = sbr.rel (0) target = $region149
    $region148: #{tpu_custom_call.1} parent=1 // pred_region
      %s1124 = ssub.s32 256, 256
      %1125 = vsyncadd [#allocation4], %s1124
      %s1126 = sshll.u32 [#allocation29], 4
      %s1127 = int_to_ptr.vmem [resolvable:$true] %s1126
      %1132 = dma.vmem_to_hbm [thread:$0]  %s1127, 256, %s19, [#allocation4], 128, 128, 8
    $region149: #{tpu_custom_call.1} parent=1 // pred_fallthru
      _
    // Predicated region
    $region150: #{tpu_custom_call.1} parent=1 // pred_check
      _
    $region151: #{tpu_custom_call.1} parent=1 // pred_check_branch
      %1134 = sbr.rel (0) target = $region153
    $region152: #{tpu_custom_call.1} parent=1 // pred_region
      %1135 = dma.done [#allocation4], 256
    $region153: #{tpu_custom_call.1} parent=1 // pred_fallthru
      _
    %1136 = vsyncpa [#allocation3], 1
    %1137 = vsyncpa [#allocation6], 1
    %1138 = vsyncpa [#allocation9], 1
    %1139 = vsyncpa [#allocation12], 1
    %1140 = vsyncpa [#allocation15], 1
    %1141 = vsyncpa [#allocation18], 1
    %1142 = vsyncpa [#allocation21], 1
    %1143 = vsyncpa [#allocation24], 1
    %1144 = vsyncpa [#allocation27], 1
    %1145 = vsyncpa [#allocation4], 1

</llo_original>
